<compile_context>
chip_gen: v5e
topology: v5e:2x2
jax: 0.10.0
libtpu: 0.0.40
codegen_flags: <defaults>
</compile_context>

<pallas_src>
import jax
import jax.numpy as jnp
from jax.experimental import pallas as pl
from jax.experimental.pallas import tpu as pltpu  # noqa: F401  (kept for TPU-specific params if needed)

# ----------------------------- config -------------------------------------
B          = 2          # batch_size
N_CAND     = 4          # n_candidates
N_TASKS    = 2
NUM_POS    = 2
NUM_NEG    = 2
N_PAIR     = min(NUM_POS, NUM_NEG)
S_SRC      = 16         # source_len
CAND_LEN   = 16         # candidate_len (must equal S_SRC so rows can be fused)
H          = 128        # hidden size
FFN        = 128        # FFN size
VOCAB      = 50
SEP_ID     = 2          # eos / sep token id (roberta-style)


# ------------------------ fused Pallas kernel ------------------------------
def fused_reranker_kernel(x_ref, amask_ref, psrc_ref, pc1_ref, pc2_ref,
                          l1_ref, l2_ref,
                          wqkv_ref, wo_ref, w1_ref, w2_ref,
                          loss_ref):
    """Encoder (1 layer, single head) + span mean-pool + cosine + BCE loss.

    x_ref:     [R, S, H] f32  (R = B source rows + B*n_pair candidate rows)
    amask_ref: [R, S]    f32  attention mask (1 = attend)
    psrc_ref:  [B, S]    f32  source pooling mask
    pc1/pc2:   [B*NP, S] f32  candidate-1 / candidate-2 pooling masks
    l1/l2:     [B, NP]   f32  BCE labels
    weights:   bf16 (wqkv = [H, 3H] fused Q/K/V)
    loss_ref:  [1, 1]    f32
    """
    R, S, Hd = x_ref.shape
    Bn = psrc_ref.shape[0]

    x = x_ref[...]                                     # [R, S, H] f32 (residual stream)
    x2 = x.reshape(R * S, Hd)                          # rows flattened into sublanes
    xb = x2.astype(jnp.bfloat16)

    # --- fused Q/K/V projection: one [R*S, H] x [H, 3H] MXU push ---
    qkv = jnp.dot(xb, wqkv_ref[...], preferred_element_type=jnp.float32)   # [R*S, 3H]
    q = qkv[:, :Hd].reshape(R, S, Hd)
    k = qkv[:, Hd:2 * Hd].reshape(R, S, Hd)
    v = qkv[:, 2 * Hd:].reshape(R, S, Hd)

    # --- attention scores (batched over rows), mask + softmax in f32 ---
    scale = 1.0 / (Hd ** 0.5)
    s = jax.lax.dot_general((q * scale).astype(jnp.bfloat16),
                            k.astype(jnp.bfloat16),
                            (((2,), (2,)), ((0,), (0,))),
                            preferred_element_type=jnp.float32)            # [R, S, S]
    m = amask_ref[...]                                                     # [R, S]
    s = jnp.where(m[:, None, :] > 0.0, s, -1e30)        # mask padded keys (f32)
    s = s - jnp.max(s, axis=-1, keepdims=True)
    p = jnp.exp(s)
    p = p * pl.reciprocal(jnp.sum(p, axis=-1, keepdims=True), approx=True)

    a = jax.lax.dot_general(p.astype(jnp.bfloat16), v.astype(jnp.bfloat16),
                            (((2,), (1,)), ((0,), (0,))),
                            preferred_element_type=jnp.float32)            # [R, S, H]
    a2 = a.reshape(R * S, Hd)

    # --- output projection + FFN (flattened rows, bf16 MXU) ---
    h = x2 + jnp.dot(a2.astype(jnp.bfloat16), wo_ref[...],
                     preferred_element_type=jnp.float32)
    ff = jax.nn.gelu(jnp.dot(h.astype(jnp.bfloat16), w1_ref[...],
                             preferred_element_type=jnp.float32))
    hidden = (h + jnp.dot(ff.astype(jnp.bfloat16), w2_ref[...],
                          preferred_element_type=jnp.float32)).reshape(R, S, Hd)

    # --- span mean pooling: VPU mask-multiply + sublane reduce ---
    def pool(hrows, mask):
        ssum = jnp.sum(hrows * mask[:, :, None], axis=1)                   # [n, H]
        cnt = jnp.maximum(jnp.sum(mask, axis=1, keepdims=True), 1.0)       # guard 0/0
        return ssum * pl.reciprocal(cnt, approx=True)

    src_enc = pool(hidden[:Bn], psrc_ref[...])                             # [B, H]
    c1_enc = pool(hidden[Bn:], pc1_ref[...])                               # [B*NP, H]
    c2_enc = pool(hidden[Bn:], pc2_ref[...])                               # [B*NP, H]

    NP = l1_ref.shape[1]
    c1r = c1_enc.reshape(Bn, NP, Hd)
    c2r = c2_enc.reshape(Bn, NP, Hd)
    srcr = src_enc[:, None, :]                                             # [B, 1, H]

    # --- cosine similarity + BCE-with-logits (exact math kept in f32) ---
    def cos(a_, b_):
        dot = jnp.sum(a_ * b_, axis=-1)                                    # [B, NP]
        na = jnp.sqrt(jnp.sum(a_ * a_, axis=-1))                           # [B, 1]
        nb = jnp.sqrt(jnp.sum(b_ * b_, axis=-1))                           # [B, NP]
        return dot / jnp.maximum(na * nb, 1e-8)

    s1 = cos(srcr, c1r)                                                    # [B, NP]
    s2 = cos(srcr, c2r)

    def bce_with_logits(x_, y_):
        return jnp.mean(jnp.maximum(x_, 0.0) - x_ * y_ +
                        jnp.log1p(jnp.exp(-jnp.abs(x_))))

    loss = 0.5 * (bce_with_logits(s1, l1_ref[...]) +
                  bce_with_logits(s2, l2_ref[...]))
    loss_ref[...] = jnp.reshape(loss, (1, 1))


def fused_forward(x_emb, attn_mask, psrc, pc1, pc2, l1, l2,
                  wqkv, wo, w1, w2):
    """Single pallas_call, no grid — everything lives in VMEM (<1 MiB total)."""
    out = pl.pallas_call(
        fused_reranker_kernel,
        out_shape=jax.ShapeDtypeStruct((1, 1), jnp.float32),
    )(x_emb, attn_mask, psrc, pc1, pc2, l1, l2, wqkv, wo, w1, w2)
    return out[0, 0]


# ------------------------------- model glue ---------------------------------
def init_params(key):
    ks = jax.random.split(key, 7)
    s = 0.02
    return {
        "emb": jax.random.normal(ks[0], (VOCAB, H), jnp.float32) * s,
        "wq":  jax.random.normal(ks[1], (H, H), jnp.float32) * s,
        "wk":  jax.random.normal(ks[2], (H, H), jnp.float32) * s,
        "wv":  jax.random.normal(ks[3], (H, H), jnp.float32) * s,
        "wo":  jax.random.normal(ks[4], (H, H), jnp.float32) * s,
        "w1":  jax.random.normal(ks[5], (H, FFN), jnp.float32) * s,
        "w2":  jax.random.normal(ks[6], (FFN, H), jnp.float32) * s,
    }


def forward_training(params, source_ids, source_mask,
                     candidate_pair_ids, candidate_pair_mask, scores, rng_key):
    batch_size, n_candidates, _, cand_len = candidate_pair_ids.shape
    src_len = source_ids.shape[1]

    # ---- pair sub-sampling (matches training branch of the PyTorch forward) ----
    scores_sum = scores.sum(axis=-1)                                # [B, n_cand]
    sorted_idx = jnp.argsort(-scores_sum, axis=1)                   # descending
    pos_idx = sorted_idx[:, :N_PAIR]
    neg_idx = sorted_idx[:, -N_PAIR:]

    shuffle_flag = jax.random.uniform(rng_key, (batch_size, N_PAIR)) < 0.5
    left_idx = jnp.where(shuffle_flag, neg_idx, pos_idx)
    right_idx = jnp.where(shuffle_flag, pos_idx, neg_idx)

    bidx = jnp.arange(batch_size)[:, None]
    pair_ids = candidate_pair_ids[bidx, left_idx, right_idx]        # [B, n_pair, L]
    pair_mask = candidate_pair_mask[bidx, left_idx, right_idx]
    dif_scores = scores_sum[bidx, left_idx] - scores_sum[bidx, right_idx]
    left_labels = (dif_scores > 0).astype(jnp.float32)              # [B, n_pair]
    right_labels = (dif_scores < 0).astype(jnp.float32)

    # ---- pooling masks (span selection done in glue; reductions in kernel) ----
    # source: mean over tokens [1 : sep_idx)
    spos = jnp.arange(src_len)
    src_sep = jnp.argmax(source_ids == SEP_ID, axis=1)              # one SEP per row
    psrc = ((spos[None, :] >= 1) &
            (spos[None, :] < src_sep[:, None])).astype(jnp.float32)         # [B, S]

    flat_pair_ids = pair_ids.reshape(-1, cand_len)                  # [B*n_pair, L]
    flat_pair_mask = pair_mask.reshape(-1, cand_len).astype(jnp.float32)
    cpos = jnp.arange(cand_len)
    is_sep = flat_pair_ids == SEP_ID                                # exactly two SEPs/row
    sep1 = jnp.min(jnp.where(is_sep, cpos[None, :], cand_len), axis=1)
    sep2 = jnp.max(jnp.where(is_sep, cpos[None, :], -1), axis=1)
    pc1 = ((cpos[None, :] >= 1) &
           (cpos[None, :] < sep1[:, None])).astype(jnp.float32)              # [B*NP, L]
    pc2 = ((cpos[None, :] >= sep1[:, None] + 1) &
           (cpos[None, :] < sep2[:, None])).astype(jnp.float32)

    # ---- build fused activation slab: source rows ++ candidate rows ----
    x_emb = jnp.concatenate([params["emb"][source_ids],
                             params["emb"][flat_pair_ids]], axis=0)          # [R, S, H]
    amask = jnp.concatenate([source_mask.astype(jnp.float32),
                             flat_pair_mask], axis=0)                        # [R, S]

    # fused bf16 weights (source & candidate encoders share weights, per deepcopy)
    wqkv = jnp.concatenate([params["wq"], params["wk"], params["wv"]],
                           axis=1).astype(jnp.bfloat16)                      # [H, 3H]
    loss = fused_forward(x_emb, amask, psrc, pc1, pc2,
                         left_labels, right_labels,
                         wqkv,
                         params["wo"].astype(jnp.bfloat16),
                         params["w1"].astype(jnp.bfloat16),
                         params["w2"].astype(jnp.bfloat16))
    return {"loss": loss}


forward_training_jit = jax.jit(forward_training)


# --------------------------------- main -------------------------------------
if __name__ == "__main__":
    assert S_SRC == CAND_LEN, "fused row slab requires equal source/candidate length"

    key = jax.random.PRNGKey(0)
    k_par, k_src, k_cand, k_scores, k_shuffle = jax.random.split(key, 5)

    params = init_params(k_par)

    # source: [CLS]=0 at pos 0, SEP at pos 10, valid length 14
    source_ids = jax.random.randint(k_src, (B, S_SRC), 3, VOCAB, dtype=jnp.int32)
    source_ids = source_ids.at[:, 0].set(0)
    source_ids = source_ids.at[:, 10].set(SEP_ID)
    src_pos = jnp.arange(S_SRC)
    source_attention_mask = (src_pos[None, :] < 14).astype(jnp.int32) * jnp.ones((B, 1), jnp.int32)

    # candidate pairs: [CLS]=0 at pos 0, SEPs at pos 6 and 12, valid length 15
    candidate_pair_ids = jax.random.randint(
        k_cand, (B, N_CAND, N_CAND, CAND_LEN), 3, VOCAB, dtype=jnp.int32)
    candidate_pair_ids = candidate_pair_ids.at[..., 0].set(0)
    candidate_pair_ids = candidate_pair_ids.at[..., 6].set(SEP_ID)
    candidate_pair_ids = candidate_pair_ids.at[..., 12].set(SEP_ID)
    cand_pos = jnp.arange(CAND_LEN)
    candidate_pair_attention_mask = jnp.broadcast_to(
        (cand_pos < 15).astype(jnp.int32), (B, N_CAND, N_CAND, CAND_LEN))

    scores = jax.random.normal(k_scores, (B, N_CAND, N_TASKS), jnp.float32)

    outputs = forward_training_jit(params, source_ids, source_attention_mask,
                                   candidate_pair_ids, candidate_pair_attention_mask,
                                   scores, k_shuffle)
    loss = jax.block_until_ready(outputs["loss"])
    assert jnp.isfinite(loss)
    print("KERNEL_OK")
</pallas_src>

<mosaic_0001>
module attributes {stable_mosaic.version = 11 : i64} {
  func.func @fused_reranker_kernel(%arg0: memref<6x16x128xf32, #tpu.memory_space<vmem>>, %arg1: memref<6x16xf32, #tpu.memory_space<vmem>>, %arg2: memref<2x16xf32, #tpu.memory_space<vmem>>, %arg3: memref<4x16xf32, #tpu.memory_space<vmem>>, %arg4: memref<4x16xf32, #tpu.memory_space<vmem>>, %arg5: memref<2x2xf32, #tpu.memory_space<vmem>>, %arg6: memref<2x2xf32, #tpu.memory_space<vmem>>, %arg7: memref<128x384xbf16, #tpu.memory_space<vmem>>, %arg8: memref<128x128xbf16, #tpu.memory_space<vmem>>, %arg9: memref<128x128xbf16, #tpu.memory_space<vmem>>, %arg10: memref<128x128xbf16, #tpu.memory_space<vmem>>, %arg11: memref<1x1xf32, #tpu.memory_space<vmem>>) attributes {dimension_semantics = [], scalar_prefetch = 0 : i64, scratch_operands = 0 : i64, tpu.core_type = #tpu.core_type<tc>} {
    %c0 = arith.constant 0 : index
    %c0_0 = arith.constant 0 : index
    %c0_1 = arith.constant 0 : index
    %0 = vector.load %arg0[%c0, %c0_0, %c0_1] : memref<6x16x128xf32, #tpu.memory_space<vmem>>, vector<6x16x128xf32>
    %1 = vector.shape_cast %0 : vector<6x16x128xf32> to vector<96x128xf32>
    %2 = arith.truncf %1 : vector<96x128xf32> to vector<96x128xbf16>
    %c0_2 = arith.constant 0 : index
    %c0_3 = arith.constant 0 : index
    %3 = vector.load %arg7[%c0_2, %c0_3] : memref<128x384xbf16, #tpu.memory_space<vmem>>, vector<128x384xbf16>
    %cst = arith.constant dense<0.000000e+00> : vector<96x384xf32>
    %4 = tpu.matmul %2, %3, %cst {dimension_numbers = #tpu.dot_dimension_numbers<[1], [0], [0], [1], [0, 0, 1, 1], [], []>} : vector<96x128xbf16>, vector<128x384xbf16>, vector<96x384xf32> -> vector<96x384xf32>
    %5 = vector.extract_strided_slice %4 {offsets = [0, 0], sizes = [96, 128], strides = [1, 1]} : vector<96x384xf32> to vector<96x128xf32>
    %6 = vector.shape_cast %5 : vector<96x128xf32> to vector<6x16x128xf32>
    %7 = vector.extract_strided_slice %4 {offsets = [0, 128], sizes = [96, 128], strides = [1, 1]} : vector<96x384xf32> to vector<96x128xf32>
    %8 = vector.shape_cast %7 : vector<96x128xf32> to vector<6x16x128xf32>
    %9 = vector.extract_strided_slice %4 {offsets = [0, 256], sizes = [96, 128], strides = [1, 1]} : vector<96x384xf32> to vector<96x128xf32>
    %10 = vector.shape_cast %9 : vector<96x128xf32> to vector<6x16x128xf32>
    %cst_4 = arith.constant 0.0883883461 : f32
    %11 = vector.broadcast %cst_4 : f32 to vector<6x16x128xf32>
    %12 = arith.mulf %6, %11 : vector<6x16x128xf32>
    %13 = arith.truncf %12 : vector<6x16x128xf32> to vector<6x16x128xbf16>
    %14 = arith.truncf %8 : vector<6x16x128xf32> to vector<6x16x128xbf16>
    %cst_5 = arith.constant dense<0.000000e+00> : vector<6x16x16xf32>
    %15 = tpu.matmul %13, %14, %cst_5 {dimension_numbers = #tpu.dot_dimension_numbers<[2], [2], [1], [1], [0, 0, 0, 1, 1, 1], [0], [0]>} : vector<6x16x128xbf16>, vector<6x16x128xbf16>, vector<6x16x16xf32> -> vector<6x16x16xf32>
    %c0_6 = arith.constant 0 : index
    %c0_7 = arith.constant 0 : index
    %16 = vector.load %arg1[%c0_6, %c0_7] : memref<6x16xf32, #tpu.memory_space<vmem>>, vector<6x16xf32>
    %17 = vector.shape_cast %16 : vector<6x16xf32> to vector<6x1x16xf32>
    %cst_8 = arith.constant 0.000000e+00 : f32
    %18 = vector.broadcast %cst_8 : f32 to vector<6x1x16xf32>
    %19 = arith.cmpf ogt, %17, %18 : vector<6x1x16xf32>
    %cst_9 = arith.constant -1.000000e+30 : f32
    %20 = vector.shape_cast %19 : vector<6x1x16xi1> to vector<6x1x16xi1>
    %21 = vector.broadcast %20 : vector<6x1x16xi1> to vector<6x16x16xi1>
    %22 = vector.broadcast %cst_9 : f32 to vector<6x16x16xf32>
    %23 = arith.select %21, %15, %22 : vector<6x16x16xi1>, vector<6x16x16xf32>
    %cst_10 = arith.constant dense<0xFF800000> : vector<6x16xf32>
    %24 = vector.multi_reduction <maximumf>, %23, %cst_10 [2] : vector<6x16x16xf32> to vector<6x16xf32>
    %25 = vector.shape_cast %24 : vector<6x16xf32> to vector<6x16x1xf32>
    %26 = vector.broadcast %25 : vector<6x16x1xf32> to vector<6x16x16xf32>
    %27 = arith.subf %23, %26 : vector<6x16x16xf32>
    %28 = math.exp %27 : vector<6x16x16xf32>
    %cst_11 = arith.constant dense<0.000000e+00> : vector<6x16xf32>
    %29 = vector.multi_reduction <add>, %28, %cst_11 [2] : vector<6x16x16xf32> to vector<6x16xf32>
    %30 = vector.shape_cast %29 : vector<6x16xf32> to vector<6x16x1xf32>
    %31 = tpu.reciprocal %30 {approx = true} : vector<6x16x1xf32> -> vector<6x16x1xf32>
    %32 = vector.broadcast %31 : vector<6x16x1xf32> to vector<6x16x16xf32>
    %33 = arith.mulf %28, %32 : vector<6x16x16xf32>
    %34 = arith.truncf %33 : vector<6x16x16xf32> to vector<6x16x16xbf16>
    %35 = arith.truncf %10 : vector<6x16x128xf32> to vector<6x16x128xbf16>
    %cst_12 = arith.constant dense<0.000000e+00> : vector<6x16x128xf32>
    %36 = tpu.matmul %34, %35, %cst_12 {dimension_numbers = #tpu.dot_dimension_numbers<[2], [1], [1], [2], [0, 0, 0, 1, 1, 2], [0], [0]>} : vector<6x16x16xbf16>, vector<6x16x128xbf16>, vector<6x16x128xf32> -> vector<6x16x128xf32>
    %37 = vector.shape_cast %36 : vector<6x16x128xf32> to vector<96x128xf32>
    %38 = arith.truncf %37 : vector<96x128xf32> to vector<96x128xbf16>
    %c0_13 = arith.constant 0 : index
    %c0_14 = arith.constant 0 : index
    %39 = vector.load %arg8[%c0_13, %c0_14] : memref<128x128xbf16, #tpu.memory_space<vmem>>, vector<128x128xbf16>
    %cst_15 = arith.constant dense<0.000000e+00> : vector<96x128xf32>
    %40 = tpu.matmul %38, %39, %cst_15 {dimension_numbers = #tpu.dot_dimension_numbers<[1], [0], [0], [1], [0, 0, 1, 1], [], []>} : vector<96x128xbf16>, vector<128x128xbf16>, vector<96x128xf32> -> vector<96x128xf32>
    %41 = arith.addf %1, %40 : vector<96x128xf32>
    %42 = arith.truncf %41 : vector<96x128xf32> to vector<96x128xbf16>
    %c0_16 = arith.constant 0 : index
    %c0_17 = arith.constant 0 : index
    %43 = vector.load %arg9[%c0_16, %c0_17] : memref<128x128xbf16, #tpu.memory_space<vmem>>, vector<128x128xbf16>
    %cst_18 = arith.constant dense<0.000000e+00> : vector<96x128xf32>
    %44 = tpu.matmul %42, %43, %cst_18 {dimension_numbers = #tpu.dot_dimension_numbers<[1], [0], [0], [1], [0, 0, 1, 1], [], []>} : vector<96x128xbf16>, vector<128x128xbf16>, vector<96x128xf32> -> vector<96x128xf32>
    %45 = arith.mulf %44, %44 : vector<96x128xf32>
    %46 = arith.mulf %44, %45 : vector<96x128xf32>
    %cst_19 = arith.constant 4.471500e-02 : f32
    %47 = vector.broadcast %cst_19 : f32 to vector<96x128xf32>
    %48 = arith.mulf %47, %46 : vector<96x128xf32>
    %49 = arith.addf %44, %48 : vector<96x128xf32>
    %cst_20 = arith.constant 0.797884583 : f32
    %50 = vector.broadcast %cst_20 : f32 to vector<96x128xf32>
    %51 = arith.mulf %50, %49 : vector<96x128xf32>
    %52 = math.tanh %51 : vector<96x128xf32>
    %cst_21 = arith.constant 1.000000e+00 : f32
    %53 = vector.broadcast %cst_21 : f32 to vector<96x128xf32>
    %54 = arith.addf %53, %52 : vector<96x128xf32>
    %cst_22 = arith.constant 5.000000e-01 : f32
    %55 = vector.broadcast %cst_22 : f32 to vector<96x128xf32>
    %56 = arith.mulf %55, %54 : vector<96x128xf32>
    %57 = arith.mulf %44, %56 : vector<96x128xf32>
    %58 = arith.truncf %57 : vector<96x128xf32> to vector<96x128xbf16>
    %c0_23 = arith.constant 0 : index
    %c0_24 = arith.constant 0 : index
    %59 = vector.load %arg10[%c0_23, %c0_24] : memref<128x128xbf16, #tpu.memory_space<vmem>>, vector<128x128xbf16>
    %cst_25 = arith.constant dense<0.000000e+00> : vector<96x128xf32>
    %60 = tpu.matmul %58, %59, %cst_25 {dimension_numbers = #tpu.dot_dimension_numbers<[1], [0], [0], [1], [0, 0, 1, 1], [], []>} : vector<96x128xbf16>, vector<128x128xbf16>, vector<96x128xf32> -> vector<96x128xf32>
    %61 = arith.addf %41, %60 : vector<96x128xf32>
    %62 = vector.shape_cast %61 : vector<96x128xf32> to vector<6x16x128xf32>
    %63 = vector.extract_strided_slice %62 {offsets = [0, 0, 0], sizes = [2, 16, 128], strides = [1, 1, 1]} : vector<6x16x128xf32> to vector<2x16x128xf32>
    %c0_26 = arith.constant 0 : index
    %c0_27 = arith.constant 0 : index
    %64 = vector.load %arg2[%c0_26, %c0_27] : memref<2x16xf32, #tpu.memory_space<vmem>>, vector<2x16xf32>
    %65 = vector.shape_cast %64 : vector<2x16xf32> to vector<2x16x1xf32>
    %66 = vector.broadcast %65 : vector<2x16x1xf32> to vector<2x16x128xf32>
    %67 = arith.mulf %63, %66 : vector<2x16x128xf32>
    %cst_28 = arith.constant dense<0.000000e+00> : vector<2x128xf32>
    %68 = vector.multi_reduction <add>, %67, %cst_28 [1] : vector<2x16x128xf32> to vector<2x128xf32>
    %cst_29 = arith.constant dense<0.000000e+00> : vector<2xf32>
    %69 = vector.multi_reduction <add>, %64, %cst_29 [1] : vector<2x16xf32> to vector<2xf32>
    %70 = vector.shape_cast %69 : vector<2xf32> to vector<2x1xf32>
    %cst_30 = arith.constant 1.000000e+00 : f32
    %71 = vector.broadcast %cst_30 : f32 to vector<2x1xf32>
    %72 = arith.maximumf %70, %71 : vector<2x1xf32>
    %73 = tpu.reciprocal %72 {approx = true} : vector<2x1xf32> -> vector<2x1xf32>
    %74 = vector.broadcast %73 : vector<2x1xf32> to vector<2x128xf32>
    %75 = arith.mulf %68, %74 : vector<2x128xf32>
    %76 = vector.extract_strided_slice %62 {offsets = [2, 0, 0], sizes = [4, 16, 128], strides = [1, 1, 1]} : vector<6x16x128xf32> to vector<4x16x128xf32>
    %c0_31 = arith.constant 0 : index
    %c0_32 = arith.constant 0 : index
    %77 = vector.load %arg3[%c0_31, %c0_32] : memref<4x16xf32, #tpu.memory_space<vmem>>, vector<4x16xf32>
    %78 = vector.shape_cast %77 : vector<4x16xf32> to vector<4x16x1xf32>
    %79 = vector.broadcast %78 : vector<4x16x1xf32> to vector<4x16x128xf32>
    %80 = arith.mulf %76, %79 : vector<4x16x128xf32>
    %cst_33 = arith.constant dense<0.000000e+00> : vector<4x128xf32>
    %81 = vector.multi_reduction <add>, %80, %cst_33 [1] : vector<4x16x128xf32> to vector<4x128xf32>
    %cst_34 = arith.constant dense<0.000000e+00> : vector<4xf32>
    %82 = vector.multi_reduction <add>, %77, %cst_34 [1] : vector<4x16xf32> to vector<4xf32>
    %83 = vector.shape_cast %82 : vector<4xf32> to vector<4x1xf32>
    %cst_35 = arith.constant 1.000000e+00 : f32
    %84 = vector.broadcast %cst_35 : f32 to vector<4x1xf32>
    %85 = arith.maximumf %83, %84 : vector<4x1xf32>
    %86 = tpu.reciprocal %85 {approx = true} : vector<4x1xf32> -> vector<4x1xf32>
    %87 = vector.broadcast %86 : vector<4x1xf32> to vector<4x128xf32>
    %88 = arith.mulf %81, %87 : vector<4x128xf32>
    %89 = vector.extract_strided_slice %62 {offsets = [2, 0, 0], sizes = [4, 16, 128], strides = [1, 1, 1]} : vector<6x16x128xf32> to vector<4x16x128xf32>
    %c0_36 = arith.constant 0 : index
    %c0_37 = arith.constant 0 : index
    %90 = vector.load %arg4[%c0_36, %c0_37] : memref<4x16xf32, #tpu.memory_space<vmem>>, vector<4x16xf32>
    %91 = vector.shape_cast %90 : vector<4x16xf32> to vector<4x16x1xf32>
    %92 = vector.broadcast %91 : vector<4x16x1xf32> to vector<4x16x128xf32>
    %93 = arith.mulf %89, %92 : vector<4x16x128xf32>
    %cst_38 = arith.constant dense<0.000000e+00> : vector<4x128xf32>
    %94 = vector.multi_reduction <add>, %93, %cst_38 [1] : vector<4x16x128xf32> to vector<4x128xf32>
    %cst_39 = arith.constant dense<0.000000e+00> : vector<4xf32>
    %95 = vector.multi_reduction <add>, %90, %cst_39 [1] : vector<4x16xf32> to vector<4xf32>
    %96 = vector.shape_cast %95 : vector<4xf32> to vector<4x1xf32>
    %cst_40 = arith.constant 1.000000e+00 : f32
    %97 = vector.broadcast %cst_40 : f32 to vector<4x1xf32>
    %98 = arith.maximumf %96, %97 : vector<4x1xf32>
    %99 = tpu.reciprocal %98 {approx = true} : vector<4x1xf32> -> vector<4x1xf32>
    %100 = vector.broadcast %99 : vector<4x1xf32> to vector<4x128xf32>
    %101 = arith.mulf %94, %100 : vector<4x128xf32>
    %102 = vector.shape_cast %88 : vector<4x128xf32> to vector<2x2x128xf32>
    %103 = vector.shape_cast %101 : vector<4x128xf32> to vector<2x2x128xf32>
    %104 = vector.shape_cast %75 : vector<2x128xf32> to vector<2x1x128xf32>
    %105 = vector.broadcast %104 : vector<2x1x128xf32> to vector<2x2x128xf32>
    %106 = arith.mulf %105, %102 : vector<2x2x128xf32>
    %cst_41 = arith.constant dense<0.000000e+00> : vector<2x2xf32>
    %107 = vector.multi_reduction <add>, %106, %cst_41 [2] : vector<2x2x128xf32> to vector<2x2xf32>
    %108 = arith.mulf %104, %104 : vector<2x1x128xf32>
    %cst_42 = arith.constant dense<0.000000e+00> : vector<2x1xf32>
    %109 = vector.multi_reduction <add>, %108, %cst_42 [2] : vector<2x1x128xf32> to vector<2x1xf32>
    %110 = math.sqrt %109 : vector<2x1xf32>
    %111 = arith.mulf %102, %102 : vector<2x2x128xf32>
    %cst_43 = arith.constant dense<0.000000e+00> : vector<2x2xf32>
    %112 = vector.multi_reduction <add>, %111, %cst_43 [2] : vector<2x2x128xf32> to vector<2x2xf32>
    %113 = math.sqrt %112 : vector<2x2xf32>
    %114 = vector.broadcast %110 : vector<2x1xf32> to vector<2x2xf32>
    %115 = arith.mulf %114, %113 : vector<2x2xf32>
    %cst_44 = arith.constant 9.99999993E-9 : f32
    %116 = vector.broadcast %cst_44 : f32 to vector<2x2xf32>
    %117 = arith.maximumf %115, %116 : vector<2x2xf32>
    %118 = arith.divf %107, %117 : vector<2x2xf32>
    %119 = vector.broadcast %104 : vector<2x1x128xf32> to vector<2x2x128xf32>
    %120 = arith.mulf %119, %103 : vector<2x2x128xf32>
    %cst_45 = arith.constant dense<0.000000e+00> : vector<2x2xf32>
    %121 = vector.multi_reduction <add>, %120, %cst_45 [2] : vector<2x2x128xf32> to vector<2x2xf32>
    %122 = arith.mulf %104, %104 : vector<2x1x128xf32>
    %cst_46 = arith.constant dense<0.000000e+00> : vector<2x1xf32>
    %123 = vector.multi_reduction <add>, %122, %cst_46 [2] : vector<2x1x128xf32> to vector<2x1xf32>
    %124 = math.sqrt %123 : vector<2x1xf32>
    %125 = arith.mulf %103, %103 : vector<2x2x128xf32>
    %cst_47 = arith.constant dense<0.000000e+00> : vector<2x2xf32>
    %126 = vector.multi_reduction <add>, %125, %cst_47 [2] : vector<2x2x128xf32> to vector<2x2xf32>
    %127 = math.sqrt %126 : vector<2x2xf32>
    %128 = vector.broadcast %124 : vector<2x1xf32> to vector<2x2xf32>
    %129 = arith.mulf %128, %127 : vector<2x2xf32>
    %cst_48 = arith.constant 9.99999993E-9 : f32
    %130 = vector.broadcast %cst_48 : f32 to vector<2x2xf32>
    %131 = arith.maximumf %129, %130 : vector<2x2xf32>
    %132 = arith.divf %121, %131 : vector<2x2xf32>
    %c0_49 = arith.constant 0 : index
    %c0_50 = arith.constant 0 : index
    %133 = vector.load %arg5[%c0_49, %c0_50] : memref<2x2xf32, #tpu.memory_space<vmem>>, vector<2x2xf32>
    %cst_51 = arith.constant 0.000000e+00 : f32
    %134 = vector.broadcast %cst_51 : f32 to vector<2x2xf32>
    %135 = arith.maximumf %118, %134 : vector<2x2xf32>
    %136 = arith.mulf %118, %133 : vector<2x2xf32>
    %137 = arith.subf %135, %136 : vector<2x2xf32>
    %138 = math.absf %118 : vector<2x2xf32>
    %cst_52 = arith.constant 0.000000e+00 : f32
    %139 = vector.broadcast %cst_52 : f32 to vector<2x2xf32>
    %140 = arith.subf %139, %138 : vector<2x2xf32>
    %141 = math.exp %140 : vector<2x2xf32>
    %142 = math.log1p %141 : vector<2x2xf32>
    %143 = arith.addf %137, %142 : vector<2x2xf32>
    %144 = vector.shape_cast %143 : vector<2x2xf32> to vector<1x2x2xf32>
    %cst_53 = arith.constant dense<0.000000e+00> : vector<1xf32>
    %145 = vector.multi_reduction <add>, %144, %cst_53 [1, 2] : vector<1x2x2xf32> to vector<1xf32>
    %146 = vector.shape_cast %145 : vector<1xf32> to vector<1x1x1xf32>
    %147 = vector.extract %146[0, 0, 0] : f32 from vector<1x1x1xf32>
    %cst_54 = arith.constant 4.000000e+00 : f32
    %148 = arith.divf %147, %cst_54 : f32
    %c0_55 = arith.constant 0 : index
    %c0_56 = arith.constant 0 : index
    %149 = vector.load %arg6[%c0_55, %c0_56] : memref<2x2xf32, #tpu.memory_space<vmem>>, vector<2x2xf32>
    %cst_57 = arith.constant 0.000000e+00 : f32
    %150 = vector.broadcast %cst_57 : f32 to vector<2x2xf32>
    %151 = arith.maximumf %132, %150 : vector<2x2xf32>
    %152 = arith.mulf %132, %149 : vector<2x2xf32>
    %153 = arith.subf %151, %152 : vector<2x2xf32>
    %154 = math.absf %132 : vector<2x2xf32>
    %cst_58 = arith.constant 0.000000e+00 : f32
    %155 = vector.broadcast %cst_58 : f32 to vector<2x2xf32>
    %156 = arith.subf %155, %154 : vector<2x2xf32>
    %157 = math.exp %156 : vector<2x2xf32>
    %158 = math.log1p %157 : vector<2x2xf32>
    %159 = arith.addf %153, %158 : vector<2x2xf32>
    %160 = vector.shape_cast %159 : vector<2x2xf32> to vector<1x2x2xf32>
    %cst_59 = arith.constant dense<0.000000e+00> : vector<1xf32>
    %161 = vector.multi_reduction <add>, %160, %cst_59 [1, 2] : vector<1x2x2xf32> to vector<1xf32>
    %162 = vector.shape_cast %161 : vector<1xf32> to vector<1x1x1xf32>
    %163 = vector.extract %162[0, 0, 0] : f32 from vector<1x1x1xf32>
    %cst_60 = arith.constant 4.000000e+00 : f32
    %164 = arith.divf %163, %cst_60 : f32
    %165 = arith.addf %148, %164 : f32
    %cst_61 = arith.constant 5.000000e-01 : f32
    %166 = arith.mulf %cst_61, %165 : f32
    %167 = vector.broadcast %166 : f32 to vector<1x1xf32>
    %c0_62 = arith.constant 0 : index
    %c0_63 = arith.constant 0 : index
    %168 = vector.load %arg11[%c0_62, %c0_63] : memref<1x1xf32, #tpu.memory_space<vmem>>, vector<1x1xf32>
    tpu.vector_store %arg11[%c0_62, %c0_63], %167 {strides = array<i32>} : memref<1x1xf32, #tpu.memory_space<vmem>>, vector<1x1xf32>,
    return
  }
}

</mosaic_0001>

<llo_original>
// kernel: neg.1
$region0: #{neg.1}
  #allocation0 [shape = 's32[1]{0}', space=sflag, size = 0x4, scoped, tag = 'scoped memory for neg.1']
  %s0 = inlined_call_operand.vmem [shape: f32[2,4], index: 0, kind: input, shape index: {}]
  %s1 = inlined_call_operand.vmem [shape: f32[2,4], index: 1, kind: output, shape index: {}]
  %v2 = vld [vmem:[%s0] sm:$0x3]
  %3 = xla_tuple %v2
  %4 = xla_tuple %3
  %v5 = vxor.u32 %v2, 2147483648
  %6 = xla_tuple %v5
  %7 = vst [vmem:[%s1] sm:$0x3] %v5

// kernel: lt.71
$region0: #{lt.71}
  %s0 = inlined_call_operand.vmem [shape: s32[2,2], index: 0, kind: input, shape index: {}]
  %s1 = inlined_call_operand.vmem [shape: s32[4], index: 1, kind: output, shape index: {}]
  $region1: #{lt.71} parent=0
    #allocation0 [shape = 'u8[4096]{0}', space=vmem, size = 0x1000, scoped, tag = 'scoped mem for output reshape']
    #allocation1 [shape = 'u8[4096]{0}', space=vmem, size = 0x1000, scoped, tag = 'scoped mem for input reshape']
    %s3 = ssub.s32 4, 1
    %v4 = vld [vmem:[%s0] sm:%s3]
    %5 = vst [vmem:[#allocation1] sm:%s3] %v4
    %v6 = vld [vmem:[#allocation1] sm:$0x1]
    %vm7 = vcmask 15360
    %8 = vst.msk [vmem:[#allocation0] sm:$0x1] %vm7, %v6
    %s9 = scalar_lea.vmem [#allocation1], 1
    %v10 = vld [vmem:[%s9] sm:$0x1]
    %11 = vrot.lane.b32.xlu0 %v10, 2
    %v12 = vpop.permute.xlu0 %11
    %vm13 = vcmask 31760
    %14 = vst.msk [vmem:[#allocation0] sm:$0x1] %vm13, %v12
    %s16 = ssub.s32 2, 1
    %v17 = vld [vmem:[#allocation0] sm:%s16]
    %s19 = ssub.s32 2, 1
    %20 = vst [vmem:[%s1] sm:%s19] %v17

// kernel: forward_training.1
$region0: #{forward_training.1}
  #allocation0 [shape = 'u32[]', space=smem, size = 0x4, offset = 0x4, fixed_abs, tag = 'smem constant byte address 0x4 - core index']
  #allocation1 [shape = 'u32[72,128]{1,0:T(1,128)}', space=vmem, size = 0x9000, scoped, tag = 'internal scratch']
  %s0 = inlined_call_operand.vmem [shape: f32[6,16,128], index: 0, kind: input, shape index: {}]
  %s1 = inlined_call_operand.vmem [shape: f32[6,16], index: 1, kind: input, shape index: {}]
  %s2 = inlined_call_operand.vmem [shape: f32[2,16], index: 2, kind: input, shape index: {}]
  %s3 = inlined_call_operand.vmem [shape: f32[4,16], index: 3, kind: input, shape index: {}]
  %s4 = inlined_call_operand.vmem [shape: f32[4,16], index: 4, kind: input, shape index: {}]
  %s5 = inlined_call_operand.vmem [shape: f32[2,2], index: 5, kind: input, shape index: {}]
  %s6 = inlined_call_operand.vmem [shape: f32[2,2], index: 6, kind: input, shape index: {}]
  %s7 = inlined_call_operand.vmem [shape: bf16[128,384], index: 7, kind: input, shape index: {}]
  %s8 = inlined_call_operand.vmem [shape: bf16[128,128], index: 8, kind: input, shape index: {}]
  %s9 = inlined_call_operand.vmem [shape: bf16[128,128], index: 9, kind: input, shape index: {}]
  %s10 = inlined_call_operand.vmem [shape: bf16[128,128], index: 10, kind: input, shape index: {}]
  %s11 = inlined_call_operand.hbm [shape: f32[1,1], index: 11, kind: output, shape index: {}]
  %s12 = sld [smem:[#allocation0]]
  $region54: #{forward_training.1} parent=0
    _
  %s14 = ssub.s32 1, %s12
  %s15 = scalar_select 0, %s14, %s12
  $region1: #{forward_training.1} parent=0
    #allocation2 [shape = 'u8[512]{0}', space=vmem, size = 0x400, scoped, tag = 'output window, operand 0, single buffered']
    #allocation3 [shape = 's32[1]{0}', space=sflag, size = 0x4, scoped, tag = 'scoped memory for forward_training.1']
    %16 = vsyncpa [#allocation3], 0
    // Predicated region
    $region2: #{forward_training.1} parent=1 // pred_check
      _
    $region3: #{forward_training.1} parent=1 // pred_check_branch
      %18 = sbr.rel (0) target = $region5
    $region4: #{forward_training.1} parent=1 // pred_region
      _
    $region5: #{forward_training.1} parent=1 // pred_fallthru
      _
    // Predicated region
    $region6: #{forward_training.1} parent=1 // pred_check
      _
    $region7: #{forward_training.1} parent=1 // pred_check_branch
      %20 = sbr.rel (0) target = $region9
    $region8: #{forward_training.1} parent=1 // pred_region
      _
    $region9: #{forward_training.1} parent=1 // pred_fallthru
      _
    // Predicated region
    $region10: #{forward_training.1} parent=1 // pred_check
      _
    $region11: #{forward_training.1} parent=1 // pred_check_branch
      %22 = sbr.rel (0) target = $region13
    $region12: #{forward_training.1} parent=1 // pred_region
      _
    $region13: #{forward_training.1} parent=1 // pred_fallthru
      _
    // Predicated region
    $region14: #{forward_training.1} parent=1 // pred_check
      _
    $region15: #{forward_training.1} parent=1 // pred_check_branch
      %24 = sbr.rel (0) target = $region17
    $region16: #{forward_training.1} parent=1 // pred_region
      _
    $region17: #{forward_training.1} parent=1 // pred_fallthru
      _
    // Predicated region
    $region18: #{forward_training.1} parent=1 // pred_check
      _
    $region19: #{forward_training.1} parent=1 // pred_check_branch
      %26 = sbr.rel (0) target = $region21
    $region20: #{forward_training.1} parent=1 // pred_region
      _
    $region21: #{forward_training.1} parent=1 // pred_fallthru
      _
    // Predicated region
    $region22: #{forward_training.1} parent=1 // pred_check
      _
    $region23: #{forward_training.1} parent=1 // pred_check_branch
      %28 = sbr.rel (0) target = $region25
    $region24: #{forward_training.1} parent=1 // pred_region
      _
    $region25: #{forward_training.1} parent=1 // pred_fallthru
      _
    // Predicated region
    $region26: #{forward_training.1} parent=1 // pred_check
      _
    $region27: #{forward_training.1} parent=1 // pred_check_branch
      %30 = sbr.rel (0) target = $region29
    $region28: #{forward_training.1} parent=1 // pred_region
      _
    $region29: #{forward_training.1} parent=1 // pred_fallthru
      _
    // Predicated region
    $region30: #{forward_training.1} parent=1 // pred_check
      _
    $region31: #{forward_training.1} parent=1 // pred_check_branch
      %32 = sbr.rel (0) target = $region33
    $region32: #{forward_training.1} parent=1 // pred_region
      _
    $region33: #{forward_training.1} parent=1 // pred_fallthru
      _
    // Predicated region
    $region34: #{forward_training.1} parent=1 // pred_check
      _
    $region35: #{forward_training.1} parent=1 // pred_check_branch
      %34 = sbr.rel (0) target = $region37
    $region36: #{forward_training.1} parent=1 // pred_region
      _
    $region37: #{forward_training.1} parent=1 // pred_fallthru
      _
    // Predicated region
    $region38: #{forward_training.1} parent=1 // pred_check
      _
    $region39: #{forward_training.1} parent=1 // pred_check_branch
      %36 = sbr.rel (0) target = $region41
    $region40: #{forward_training.1} parent=1 // pred_region
      _
    $region41: #{forward_training.1} parent=1 // pred_fallthru
      _
    // Predicated region
    $region42: #{forward_training.1} parent=1 // pred_check
      _
    $region43: #{forward_training.1} parent=1 // pred_check_branch
      %38 = sbr.rel (0) target = $region45
    $region44: #{forward_training.1} parent=1 // pred_region
      _
    $region45: #{forward_training.1} parent=1 // pred_fallthru
      _
    %v40 = vld [vmem:[%s0] sm:$0xff]
    %v41 = vld [vmem:[%s0 + $0x8] sm:$0xff]
    %v42 = vld [vmem:[%s0 + $0x10] sm:$0xff]
    %v43 = vld [vmem:[%s0 + $0x18] sm:$0xff]
    %v44 = vld [vmem:[%s0 + $0x20] sm:$0xff]
    %v45 = vld [vmem:[%s0 + $0x28] sm:$0xff]
    %v46 = vld [vmem:[%s0 + $0x30] sm:$0xff]
    %v47 = vld [vmem:[%s0 + $0x38] sm:$0xff]
    %v48 = vld [vmem:[%s0 + $0x40] sm:$0xff]
    %v49 = vld [vmem:[%s0 + $0x48] sm:$0xff]
    %v50 = vld [vmem:[%s0 + $0x50] sm:$0xff]
    %v51 = vld [vmem:[%s0 + $0x58] sm:$0xff]
    %v52 = vpack.c.bf16 %v41, %v40
    %v53 = vpack.c.bf16 %v43, %v42
    %v54 = vpack.c.bf16 %v45, %v44
    %v55 = vpack.c.bf16 %v47, %v46
    %v56 = vpack.c.bf16 %v49, %v48
    %v57 = vpack.c.bf16 %v51, %v50
    %v58 = vld [vmem:[%s7] sm:$0xff]
    %v59 = vld [vmem:[%s7 + $0x8] sm:$0xf]
    %v60 = vld [vmem:[%s7 + $0xc] sm:$0xff]
    %v61 = vld [vmem:[%s7 + $0x14] sm:$0xf]
    %v62 = vld [vmem:[%s7 + $0x18] sm:$0xff]
    %v63 = vld [vmem:[%s7 + $0x20] sm:$0xf]
    %v64 = vld [vmem:[%s7 + $0x24] sm:$0xff]
    %v65 = vld [vmem:[%s7 + $0x2c] sm:$0xf]
    %v66 = vld [vmem:[%s7 + $0x30] sm:$0xff]
    %v67 = vld [vmem:[%s7 + $0x38] sm:$0xf]
    %v68 = vld [vmem:[%s7 + $0x3c] sm:$0xff]
    %v69 = vld [vmem:[%s7 + $0x44] sm:$0xf]
    %v70 = vld [vmem:[%s7 + $0x48] sm:$0xff]
    %v71 = vld [vmem:[%s7 + $0x50] sm:$0xf]
    %v72 = vld [vmem:[%s7 + $0x54] sm:$0xff]
    %v73 = vld [vmem:[%s7 + $0x5c] sm:$0xf]
    %v74 = vld [vmem:[%s7 + $0x60] sm:$0xff]
    %v75 = vld [vmem:[%s7 + $0x68] sm:$0xf]
    %v76 = vld [vmem:[%s7 + $0x6c] sm:$0xff]
    %v77 = vld [vmem:[%s7 + $0x74] sm:$0xf]
    %v78 = vld [vmem:[%s7 + $0x78] sm:$0xff]
    %v79 = vld [vmem:[%s7 + $0x80] sm:$0xf]
    %v80 = vld [vmem:[%s7 + $0x84] sm:$0xff]
    %v81 = vld [vmem:[%s7 + $0x8c] sm:$0xf]
    %v82 = vld [vmem:[%s7 + $0x90] sm:$0xff]
    %v83 = vld [vmem:[%s7 + $0x98] sm:$0xf]
    %v84 = vld [vmem:[%s7 + $0x9c] sm:$0xff]
    %v85 = vld [vmem:[%s7 + $0xa4] sm:$0xf]
    %v86 = vld [vmem:[%s7 + $0xa8] sm:$0xff]
    %v87 = vld [vmem:[%s7 + $0xb0] sm:$0xf]
    %v88 = vld [vmem:[%s7 + $0xb4] sm:$0xff]
    %v89 = vld [vmem:[%s7 + $0xbc] sm:$0xf]
    %v122 = vunpack.c.l.b16 %v58
    %v123 = vunpack.c.h.b16 %v58
    %v124 = vunpack.c.l.b16 %v59
    %v125 = vunpack.c.l.b16 %v60
    %v126 = vunpack.c.h.b16 %v60
    %v127 = vunpack.c.l.b16 %v61
    %v128 = vunpack.c.l.b16 %v62
    %v129 = vunpack.c.h.b16 %v62
    %v130 = vunpack.c.l.b16 %v63
    %v131 = vunpack.c.l.b16 %v64
    %v132 = vunpack.c.h.b16 %v64
    %v133 = vunpack.c.l.b16 %v65
    %v134 = vunpack.c.l.b16 %v66
    %v135 = vunpack.c.h.b16 %v66
    %v136 = vunpack.c.l.b16 %v67
    %v137 = vunpack.c.l.b16 %v68
    %v138 = vunpack.c.h.b16 %v68
    %v139 = vunpack.c.l.b16 %v69
    %v140 = vunpack.c.l.b16 %v70
    %v141 = vunpack.c.h.b16 %v70
    %v142 = vunpack.c.l.b16 %v71
    %v143 = vunpack.c.l.b16 %v72
    %v144 = vunpack.c.h.b16 %v72
    %v145 = vunpack.c.l.b16 %v73
    %v146 = vunpack.c.l.b16 %v74
    %v147 = vunpack.c.h.b16 %v74
    %v148 = vunpack.c.l.b16 %v75
    %v149 = vunpack.c.l.b16 %v76
    %v150 = vunpack.c.h.b16 %v76
    %v151 = vunpack.c.l.b16 %v77
    %v152 = vunpack.c.l.b16 %v78
    %v153 = vunpack.c.h.b16 %v78
    %v154 = vunpack.c.l.b16 %v79
    %v155 = vunpack.c.l.b16 %v80
    %v156 = vunpack.c.h.b16 %v80
    %v157 = vunpack.c.l.b16 %v81
    %v158 = vunpack.c.l.b16 %v82
    %v159 = vunpack.c.h.b16 %v82
    %v160 = vunpack.c.l.b16 %v83
    %v161 = vunpack.c.l.b16 %v84
    %v162 = vunpack.c.h.b16 %v84
    %v163 = vunpack.c.l.b16 %v85
    %v164 = vunpack.c.l.b16 %v86
    %v165 = vunpack.c.h.b16 %v86
    %v166 = vunpack.c.l.b16 %v87
    %v167 = vunpack.c.l.b16 %v88
    %v168 = vunpack.c.h.b16 %v88
    %v169 = vunpack.c.l.b16 %v89
    %v170 = vpack.c.b16 %v125, %v122
    %v171 = vpack.c.b16 %v126, %v123
    %v172 = vpack.c.b16 %v127, %v124
    %v173 = vpack.c.b16 %v131, %v128
    %v174 = vpack.c.b16 %v132, %v129
    %v175 = vpack.c.b16 %v133, %v130
    %v176 = vpack.c.b16 %v137, %v134
    %v177 = vpack.c.b16 %v138, %v135
    %v178 = vpack.c.b16 %v139, %v136
    %v179 = vpack.c.b16 %v143, %v140
    %v180 = vpack.c.b16 %v144, %v141
    %v181 = vpack.c.b16 %v145, %v142
    %v182 = vpack.c.b16 %v149, %v146
    %v183 = vpack.c.b16 %v150, %v147
    %v184 = vpack.c.b16 %v151, %v148
    %v185 = vpack.c.b16 %v155, %v152
    %v186 = vpack.c.b16 %v156, %v153
    %v187 = vpack.c.b16 %v157, %v154
    %v188 = vpack.c.b16 %v161, %v158
    %v189 = vpack.c.b16 %v162, %v159
    %v190 = vpack.c.b16 %v163, %v160
    %v191 = vpack.c.b16 %v167, %v164
    %v192 = vpack.c.b16 %v168, %v165
    %v193 = vpack.c.b16 %v169, %v166
    %218 = vmatpush.bf16.msra.mxu0 %v191
    %219 = vmatpush.bf16.msra.mxu0 %v188
    %220 = vmatpush.bf16.msra.mxu0 %v185
    %221 = vmatpush.bf16.msra.mxu0 %v182
    %222 = vmatpush.bf16.msra.mxu0 %v179
    %223 = vmatpush.bf16.msra.mxu0 %v176
    %224 = vmatpush.bf16.msra.mxu0 %v173
    %225 = vmatpush.bf16.msra.mxu0 %v170
    %226 = vmatmul.bf16.gmra.mxu0 %v52
    %v227 = vpop.f32.mrf.mxu0
    %v228 = vadd.f32 0.0, %v227
    %v229 = vpop.f32.mrf.mxu0
    %v230 = vadd.f32 0.0, %v229
    %231 = vmatmul.bf16.gmra.mxu0 %v53
    %v232 = vpop.f32.mrf.mxu0
    %v233 = vadd.f32 0.0, %v232
    %v234 = vpop.f32.mrf.mxu0
    %v235 = vadd.f32 0.0, %v234
    %236 = vmatmul.bf16.gmra.mxu0 %v54
    %v237 = vpop.f32.mrf.mxu0
    %v238 = vadd.f32 0.0, %v237
    %v239 = vpop.f32.mrf.mxu0
    %v240 = vadd.f32 0.0, %v239
    %241 = vmatmul.bf16.gmra.mxu0 %v55
    %v242 = vpop.f32.mrf.mxu0
    %v243 = vadd.f32 0.0, %v242
    %v244 = vpop.f32.mrf.mxu0
    %v245 = vadd.f32 0.0, %v244
    %246 = vmatmul.bf16.gmra.mxu0 %v56
    %v247 = vpop.f32.mrf.mxu0
    %v248 = vadd.f32 0.0, %v247
    %v249 = vpop.f32.mrf.mxu0
    %v250 = vadd.f32 0.0, %v249
    %251 = vmatmul.bf16.gmra.mxu0 %v57
    %v252 = vpop.f32.mrf.mxu0
    %v253 = vadd.f32 0.0, %v252
    %v254 = vpop.f32.mrf.mxu0
    %v255 = vadd.f32 0.0, %v254
    %256 = vdwg.mxu0
    %257 = vmatpush.bf16.msra.mxu0 %v192
    %258 = vmatpush.bf16.msra.mxu0 %v189
    %259 = vmatpush.bf16.msra.mxu0 %v186
    %260 = vmatpush.bf16.msra.mxu0 %v183
    %261 = vmatpush.bf16.msra.mxu0 %v180
    %262 = vmatpush.bf16.msra.mxu0 %v177
    %263 = vmatpush.bf16.msra.mxu0 %v174
    %264 = vmatpush.bf16.msra.mxu0 %v171
    %265 = vmatmul.bf16.gmra.mxu0 %v52
    %v266 = vpop.f32.mrf.mxu0
    %v267 = vadd.f32 0.0, %v266
    %v268 = vpop.f32.mrf.mxu0
    %v269 = vadd.f32 0.0, %v268
    %270 = vmatmul.bf16.gmra.mxu0 %v53
    %v271 = vpop.f32.mrf.mxu0
    %v272 = vadd.f32 0.0, %v271
    %v273 = vpop.f32.mrf.mxu0
    %v274 = vadd.f32 0.0, %v273
    %275 = vmatmul.bf16.gmra.mxu0 %v54
    %v276 = vpop.f32.mrf.mxu0
    %v277 = vadd.f32 0.0, %v276
    %v278 = vpop.f32.mrf.mxu0
    %v279 = vadd.f32 0.0, %v278
    %280 = vmatmul.bf16.gmra.mxu0 %v55
    %v281 = vpop.f32.mrf.mxu0
    %v282 = vadd.f32 0.0, %v281
    %v283 = vpop.f32.mrf.mxu0
    %v284 = vadd.f32 0.0, %v283
    %285 = vmatmul.bf16.gmra.mxu0 %v56
    %v286 = vpop.f32.mrf.mxu0
    %v287 = vadd.f32 0.0, %v286
    %v288 = vpop.f32.mrf.mxu0
    %v289 = vadd.f32 0.0, %v288
    %290 = vmatmul.bf16.gmra.mxu0 %v57
    %v291 = vpop.f32.mrf.mxu0
    %v292 = vadd.f32 0.0, %v291
    %v293 = vpop.f32.mrf.mxu0
    %v294 = vadd.f32 0.0, %v293
    %295 = vdwg.mxu0
    %296 = vmatpush.bf16.msra.mxu0 %v193
    %297 = vmatpush.bf16.msra.mxu0 %v190
    %298 = vmatpush.bf16.msra.mxu0 %v187
    %299 = vmatpush.bf16.msra.mxu0 %v184
    %300 = vmatpush.bf16.msra.mxu0 %v181
    %301 = vmatpush.bf16.msra.mxu0 %v178
    %302 = vmatpush.bf16.msra.mxu0 %v175
    %303 = vmatpush.bf16.msra.mxu0 %v172
    %304 = vmatmul.bf16.gmra.mxu0 %v52
    %v305 = vpop.f32.mrf.mxu0
    %v306 = vadd.f32 0.0, %v305
    %v307 = vpop.f32.mrf.mxu0
    %v308 = vadd.f32 0.0, %v307
    %309 = vmatmul.bf16.gmra.mxu0 %v53
    %v310 = vpop.f32.mrf.mxu0
    %v311 = vadd.f32 0.0, %v310
    %v312 = vpop.f32.mrf.mxu0
    %v313 = vadd.f32 0.0, %v312
    %314 = vmatmul.bf16.gmra.mxu0 %v54
    %v315 = vpop.f32.mrf.mxu0
    %v316 = vadd.f32 0.0, %v315
    %v317 = vpop.f32.mrf.mxu0
    %v318 = vadd.f32 0.0, %v317
    %319 = vmatmul.bf16.gmra.mxu0 %v55
    %v320 = vpop.f32.mrf.mxu0
    %v321 = vadd.f32 0.0, %v320
    %v322 = vpop.f32.mrf.mxu0
    %v323 = vadd.f32 0.0, %v322
    %324 = vmatmul.bf16.gmra.mxu0 %v56
    %v325 = vpop.f32.mrf.mxu0
    %v326 = vadd.f32 0.0, %v325
    %v327 = vpop.f32.mrf.mxu0
    %v328 = vadd.f32 0.0, %v327
    %329 = vmatmul.bf16.gmra.mxu0 %v57
    %v330 = vpop.f32.mrf.mxu0
    %v331 = vadd.f32 0.0, %v330
    %v332 = vpop.f32.mrf.mxu0
    %v333 = vadd.f32 0.0, %v332
    %334 = vdwg.mxu0
    %v335 = vmul.f32 %v228, 0.088388346
    %v336 = vmul.f32 %v230, 0.088388346
    %v337 = vmul.f32 %v233, 0.088388346
    %v338 = vmul.f32 %v235, 0.088388346
    %v339 = vmul.f32 %v238, 0.088388346
    %v340 = vmul.f32 %v240, 0.088388346
    %v341 = vmul.f32 %v243, 0.088388346
    %v342 = vmul.f32 %v245, 0.088388346
    %v343 = vmul.f32 %v248, 0.088388346
    %v344 = vmul.f32 %v250, 0.088388346
    %v345 = vmul.f32 %v253, 0.088388346
    %v346 = vmul.f32 %v255, 0.088388346
    %v347 = vpack.c.bf16 %v335, %v335
    %v348 = vpack.c.bf16 %v336, %v336
    %v349 = vpack.c.bf16 %v337, %v337
    %v350 = vpack.c.bf16 %v338, %v338
    %v351 = vpack.c.bf16 %v339, %v339
    %v352 = vpack.c.bf16 %v340, %v340
    %v353 = vpack.c.bf16 %v341, %v341
    %v354 = vpack.c.bf16 %v342, %v342
    %v355 = vpack.c.bf16 %v343, %v343
    %v356 = vpack.c.bf16 %v344, %v344
    %v357 = vpack.c.bf16 %v345, %v345
    %v358 = vpack.c.bf16 %v346, %v346
    %v359 = vpack.c.bf16 %v267, %v267
    %v360 = vpack.c.bf16 %v269, %v269
    %v361 = vpack.c.bf16 %v272, %v272
    %v362 = vpack.c.bf16 %v274, %v274
    %v363 = vpack.c.bf16 %v277, %v277
    %v364 = vpack.c.bf16 %v279, %v279
    %v365 = vpack.c.bf16 %v282, %v282
    %v366 = vpack.c.bf16 %v284, %v284
    %v367 = vpack.c.bf16 %v287, %v287
    %v368 = vpack.c.bf16 %v289, %v289
    %v369 = vpack.c.bf16 %v292, %v292
    %v370 = vpack.c.bf16 %v294, %v294
    %v373 = vunpack.c.l.b16 %v347
    %v374 = vunpack.c.l.b16 %v348
    %v375 = vpack.c.b16 %v374, %v373
    %v379 = vunpack.c.l.b16 %v359
    %v380 = vunpack.c.l.b16 %v360
    %v381 = vpack.c.b16 %v380, %v379
    %383 = vmatpush.bf16.xpose.msra.mxu0 0
    %384 = vmatpush.bf16.xpose.msra.mxu0 0
    %385 = vmatpush.bf16.xpose.msra.mxu0 0
    %386 = vmatpush.bf16.xpose.msra.mxu0 0
    %387 = vmatpush.bf16.xpose.msra.mxu0 0
    %388 = vmatpush.bf16.xpose.msra.mxu0 0
    %389 = vmatpush.bf16.xpose.msra.mxu0 0
    %390 = vmatpush.bf16.xpose.msra.mxu0 %v381
    %391 = vmatmul.bf16.gmra.mxu0 %v375
    %v392 = vpop.f32.mrf.mxu0
    %v393 = vadd.f32 0.0, %v392
    %v394 = vpop.f32.mrf.mxu0
    %v395 = vadd.f32 0.0, %v394
    %396 = vdwg.mxu0
    %v399 = vunpack.c.l.b16 %v349
    %v400 = vunpack.c.l.b16 %v350
    %v401 = vpack.c.b16 %v400, %v399
    %v405 = vunpack.c.l.b16 %v361
    %v406 = vunpack.c.l.b16 %v362
    %v407 = vpack.c.b16 %v406, %v405
    %409 = vmatpush.bf16.xpose.msra.mxu0 0
    %410 = vmatpush.bf16.xpose.msra.mxu0 0
    %411 = vmatpush.bf16.xpose.msra.mxu0 0
    %412 = vmatpush.bf16.xpose.msra.mxu0 0
    %413 = vmatpush.bf16.xpose.msra.mxu0 0
    %414 = vmatpush.bf16.xpose.msra.mxu0 0
    %415 = vmatpush.bf16.xpose.msra.mxu0 0
    %416 = vmatpush.bf16.xpose.msra.mxu0 %v407
    %417 = vmatmul.bf16.gmra.mxu0 %v401
    %v418 = vpop.f32.mrf.mxu0
    %v419 = vadd.f32 0.0, %v418
    %v420 = vpop.f32.mrf.mxu0
    %v421 = vadd.f32 0.0, %v420
    %422 = vdwg.mxu0
    %v425 = vunpack.c.l.b16 %v351
    %v426 = vunpack.c.l.b16 %v352
    %v427 = vpack.c.b16 %v426, %v425
    %v431 = vunpack.c.l.b16 %v363
    %v432 = vunpack.c.l.b16 %v364
    %v433 = vpack.c.b16 %v432, %v431
    %435 = vmatpush.bf16.xpose.msra.mxu0 0
    %436 = vmatpush.bf16.xpose.msra.mxu0 0
    %437 = vmatpush.bf16.xpose.msra.mxu0 0
    %438 = vmatpush.bf16.xpose.msra.mxu0 0
    %439 = vmatpush.bf16.xpose.msra.mxu0 0
    %440 = vmatpush.bf16.xpose.msra.mxu0 0
    %441 = vmatpush.bf16.xpose.msra.mxu0 0
    %442 = vmatpush.bf16.xpose.msra.mxu0 %v433
    %443 = vmatmul.bf16.gmra.mxu0 %v427
    %v444 = vpop.f32.mrf.mxu0
    %v445 = vadd.f32 0.0, %v444
    %v446 = vpop.f32.mrf.mxu0
    %v447 = vadd.f32 0.0, %v446
    %448 = vdwg.mxu0
    %v451 = vunpack.c.l.b16 %v353
    %v452 = vunpack.c.l.b16 %v354
    %v453 = vpack.c.b16 %v452, %v451
    %v457 = vunpack.c.l.b16 %v365
    %v458 = vunpack.c.l.b16 %v366
    %v459 = vpack.c.b16 %v458, %v457
    %461 = vmatpush.bf16.xpose.msra.mxu0 0
    %462 = vmatpush.bf16.xpose.msra.mxu0 0
    %463 = vmatpush.bf16.xpose.msra.mxu0 0
    %464 = vmatpush.bf16.xpose.msra.mxu0 0
    %465 = vmatpush.bf16.xpose.msra.mxu0 0
    %466 = vmatpush.bf16.xpose.msra.mxu0 0
    %467 = vmatpush.bf16.xpose.msra.mxu0 0
    %468 = vmatpush.bf16.xpose.msra.mxu0 %v459
    %469 = vmatmul.bf16.gmra.mxu0 %v453
    %v470 = vpop.f32.mrf.mxu0
    %v471 = vadd.f32 0.0, %v470
    %v472 = vpop.f32.mrf.mxu0
    %v473 = vadd.f32 0.0, %v472
    %474 = vdwg.mxu0
    %v477 = vunpack.c.l.b16 %v355
    %v478 = vunpack.c.l.b16 %v356
    %v479 = vpack.c.b16 %v478, %v477
    %v483 = vunpack.c.l.b16 %v367
    %v484 = vunpack.c.l.b16 %v368
    %v485 = vpack.c.b16 %v484, %v483
    %487 = vmatpush.bf16.xpose.msra.mxu0 0
    %488 = vmatpush.bf16.xpose.msra.mxu0 0
    %489 = vmatpush.bf16.xpose.msra.mxu0 0
    %490 = vmatpush.bf16.xpose.msra.mxu0 0
    %491 = vmatpush.bf16.xpose.msra.mxu0 0
    %492 = vmatpush.bf16.xpose.msra.mxu0 0
    %493 = vmatpush.bf16.xpose.msra.mxu0 0
    %494 = vmatpush.bf16.xpose.msra.mxu0 %v485
    %495 = vmatmul.bf16.gmra.mxu0 %v479
    %v496 = vpop.f32.mrf.mxu0
    %v497 = vadd.f32 0.0, %v496
    %v498 = vpop.f32.mrf.mxu0
    %v499 = vadd.f32 0.0, %v498
    %500 = vdwg.mxu0
    %v503 = vunpack.c.l.b16 %v357
    %v504 = vunpack.c.l.b16 %v358
    %v505 = vpack.c.b16 %v504, %v503
    %v509 = vunpack.c.l.b16 %v369
    %v510 = vunpack.c.l.b16 %v370
    %v511 = vpack.c.b16 %v510, %v509
    %513 = vmatpush.bf16.xpose.msra.mxu0 0
    %514 = vmatpush.bf16.xpose.msra.mxu0 0
    %515 = vmatpush.bf16.xpose.msra.mxu0 0
    %516 = vmatpush.bf16.xpose.msra.mxu0 0
    %517 = vmatpush.bf16.xpose.msra.mxu0 0
    %518 = vmatpush.bf16.xpose.msra.mxu0 0
    %519 = vmatpush.bf16.xpose.msra.mxu0 0
    %520 = vmatpush.bf16.xpose.msra.mxu0 %v511
    %521 = vmatmul.bf16.gmra.mxu0 %v505
    %v522 = vpop.f32.mrf.mxu0
    %v523 = vadd.f32 0.0, %v522
    %v524 = vpop.f32.mrf.mxu0
    %v525 = vadd.f32 0.0, %v524
    %526 = vdwg.mxu0
    %v527 = vld [vmem:[%s1] sm:$0x3f]
    %v529 = vrot.slane %v527, 1
    %v530 = vrot.slane %v527, 2
    %v531 = vrot.slane %v527, 3
    %v532 = vrot.slane %v527, 4
    %v533 = vrot.slane %v527, 5
    %vm539 = vcmp.gt.f32.partialorder %v527, 0.0
    %vm540 = vcmp.gt.f32.partialorder %v529, 0.0
    %vm541 = vcmp.gt.f32.partialorder %v530, 0.0
    %vm542 = vcmp.gt.f32.partialorder %v531, 0.0
    %vm543 = vcmp.gt.f32.partialorder %v532, 0.0
    %vm544 = vcmp.gt.f32.partialorder %v533, 0.0
    %v545 = vsel %vm539, 1, 0
    %v546 = vsel %vm540, 1, 0
    %v547 = vsel %vm541, 1, 0
    %v548 = vsel %vm542, 1, 0
    %v549 = vsel %vm543, 1, 0
    %v550 = vsel %vm544, 1, 0
    %v551 = vperm.slane %v545, 0
    %v552 = vperm.slane %v546, 0
    %v553 = vperm.slane %v547, 0
    %v554 = vperm.slane %v548, 0
    %v555 = vperm.slane %v549, 0
    %v556 = vperm.slane %v550, 0
    %vm557 = vcmp.eq.s32.totalorder %v551, 1
    %vm558 = vcmp.eq.s32.totalorder %v552, 1
    %vm559 = vcmp.eq.s32.totalorder %v553, 1
    %vm560 = vcmp.eq.s32.totalorder %v554, 1
    %vm561 = vcmp.eq.s32.totalorder %v555, 1
    %vm562 = vcmp.eq.s32.totalorder %v556, 1
    %v563 = vsel %vm557, %v393, -1e+30
    %v564 = vsel %vm557, %v395, -1e+30
    %v565 = vsel %vm558, %v419, -1e+30
    %v566 = vsel %vm558, %v421, -1e+30
    %v567 = vsel %vm559, %v445, -1e+30
    %v568 = vsel %vm559, %v447, -1e+30
    %v569 = vsel %vm560, %v471, -1e+30
    %v570 = vsel %vm560, %v473, -1e+30
    %v571 = vsel %vm561, %v497, -1e+30
    %v572 = vsel %vm561, %v499, -1e+30
    %v573 = vsel %vm562, %v523, -1e+30
    %v574 = vsel %vm562, %v525, -1e+30
    %vm575 = vcmask 130048
    %v576 = vsel %vm575, %v563, -inf
    %577 = vmax.xlane.f32.xlu0 %v576
    %v578 = vpop.xlane.xlu0 %577
    %v579 = vsel %vm575, %v564, -inf
    %580 = vmax.xlane.f32.xlu0 %v579
    %v581 = vpop.xlane.xlu0 %580
    %v582 = vsel %vm575, %v565, -inf
    %583 = vmax.xlane.f32.xlu0 %v582
    %v584 = vpop.xlane.xlu0 %583
    %v585 = vsel %vm575, %v566, -inf
    %586 = vmax.xlane.f32.xlu0 %v585
    %v587 = vpop.xlane.xlu0 %586
    %v588 = vsel %vm575, %v567, -inf
    %589 = vmax.xlane.f32.xlu0 %v588
    %v590 = vpop.xlane.xlu0 %589
    %v591 = vsel %vm575, %v568, -inf
    %592 = vmax.xlane.f32.xlu0 %v591
    %v593 = vpop.xlane.xlu0 %592
    %v594 = vsel %vm575, %v569, -inf
    %595 = vmax.xlane.f32.xlu0 %v594
    %v596 = vpop.xlane.xlu0 %595
    %v597 = vsel %vm575, %v570, -inf
    %598 = vmax.xlane.f32.xlu0 %v597
    %v599 = vpop.xlane.xlu0 %598
    %v600 = vsel %vm575, %v571, -inf
    %601 = vmax.xlane.f32.xlu0 %v600
    %v602 = vpop.xlane.xlu0 %601
    %v603 = vsel %vm575, %v572, -inf
    %604 = vmax.xlane.f32.xlu0 %v603
    %v605 = vpop.xlane.xlu0 %604
    %v606 = vsel %vm575, %v573, -inf
    %607 = vmax.xlane.f32.xlu0 %v606
    %v608 = vpop.xlane.xlu0 %607
    %v609 = vsel %vm575, %v574, -inf
    %610 = vmax.xlane.f32.xlu0 %v609
    %v611 = vpop.xlane.xlu0 %610
    %v612 = vsub.f32 %v563, %v578
    %v613 = vsub.f32 %v564, %v581
    %v614 = vsub.f32 %v565, %v584
    %v615 = vsub.f32 %v566, %v587
    %v616 = vsub.f32 %v567, %v590
    %v617 = vsub.f32 %v568, %v593
    %v618 = vsub.f32 %v569, %v596
    %v619 = vsub.f32 %v570, %v599
    %v620 = vsub.f32 %v571, %v602
    %v621 = vsub.f32 %v572, %v605
    %v622 = vsub.f32 %v573, %v608
    %v623 = vsub.f32 %v574, %v611
    %v624 = vmul.f32 %v612, 1.442695
    %v625 = vpow.pop %v624
    %v626 = vmul.f32 %v613, 1.442695
    %v627 = vpow.pop %v626
    %v628 = vmul.f32 %v614, 1.442695
    %v629 = vpow.pop %v628
    %v630 = vmul.f32 %v615, 1.442695
    %v631 = vpow.pop %v630
    %v632 = vmul.f32 %v616, 1.442695
    %v633 = vpow.pop %v632
    %v634 = vmul.f32 %v617, 1.442695
    %v635 = vpow.pop %v634
    %v636 = vmul.f32 %v618, 1.442695
    %v637 = vpow.pop %v636
    %v638 = vmul.f32 %v619, 1.442695
    %v639 = vpow.pop %v638
    %v640 = vmul.f32 %v620, 1.442695
    %v641 = vpow.pop %v640
    %v642 = vmul.f32 %v621, 1.442695
    %v643 = vpow.pop %v642
    %v644 = vmul.f32 %v622, 1.442695
    %v645 = vpow.pop %v644
    %v646 = vmul.f32 %v623, 1.442695
    %v647 = vpow.pop %v646
    %v648 = vsel %vm575, %v625, 0.0
    %649 = vadd.xlane.f32.xlu0 %v648
    %v650 = vpop.xlane.xlu0 %649
    %v651 = vsel %vm575, %v627, 0.0
    %652 = vadd.xlane.f32.xlu0 %v651
    %v653 = vpop.xlane.xlu0 %652
    %v654 = vsel %vm575, %v629, 0.0
    %655 = vadd.xlane.f32.xlu0 %v654
    %v656 = vpop.xlane.xlu0 %655
    %v657 = vsel %vm575, %v631, 0.0
    %658 = vadd.xlane.f32.xlu0 %v657
    %v659 = vpop.xlane.xlu0 %658
    %v660 = vsel %vm575, %v633, 0.0
    %661 = vadd.xlane.f32.xlu0 %v660
    %v662 = vpop.xlane.xlu0 %661
    %v663 = vsel %vm575, %v635, 0.0
    %664 = vadd.xlane.f32.xlu0 %v663
    %v665 = vpop.xlane.xlu0 %664
    %v666 = vsel %vm575, %v637, 0.0
    %667 = vadd.xlane.f32.xlu0 %v666
    %v668 = vpop.xlane.xlu0 %667
    %v669 = vsel %vm575, %v639, 0.0
    %670 = vadd.xlane.f32.xlu0 %v669
    %v671 = vpop.xlane.xlu0 %670
    %v672 = vsel %vm575, %v641, 0.0
    %673 = vadd.xlane.f32.xlu0 %v672
    %v674 = vpop.xlane.xlu0 %673
    %v675 = vsel %vm575, %v643, 0.0
    %676 = vadd.xlane.f32.xlu0 %v675
    %v677 = vpop.xlane.xlu0 %676
    %v678 = vsel %vm575, %v645, 0.0
    %679 = vadd.xlane.f32.xlu0 %v678
    %v680 = vpop.xlane.xlu0 %679
    %v681 = vsel %vm575, %v647, 0.0
    %682 = vadd.xlane.f32.xlu0 %v681
    %v683 = vpop.xlane.xlu0 %682
    %v684 = vrcp.pop %v650
    %v685 = vrcp.pop %v653
    %v686 = vrcp.pop %v656
    %v687 = vrcp.pop %v659
    %v688 = vrcp.pop %v662
    %v689 = vrcp.pop %v665
    %v690 = vrcp.pop %v668
    %v691 = vrcp.pop %v671
    %v692 = vrcp.pop %v674
    %v693 = vrcp.pop %v677
    %v694 = vrcp.pop %v680
    %v695 = vrcp.pop %v683
    %v696 = vmul.f32 %v625, %v684
    %v697 = vmul.f32 %v627, %v685
    %v698 = vmul.f32 %v629, %v686
    %v699 = vmul.f32 %v631, %v687
    %v700 = vmul.f32 %v633, %v688
    %v701 = vmul.f32 %v635, %v689
    %v702 = vmul.f32 %v637, %v690
    %v703 = vmul.f32 %v639, %v691
    %v704 = vmul.f32 %v641, %v692
    %v705 = vmul.f32 %v643, %v693
    %v706 = vmul.f32 %v645, %v694
    %v707 = vmul.f32 %v647, %v695
    %v708 = vpack.c.bf16 %v696, %v696
    %v709 = vpack.c.bf16 %v697, %v697
    %v710 = vpack.c.bf16 %v698, %v698
    %v711 = vpack.c.bf16 %v699, %v699
    %v712 = vpack.c.bf16 %v700, %v700
    %v713 = vpack.c.bf16 %v701, %v701
    %v714 = vpack.c.bf16 %v702, %v702
    %v715 = vpack.c.bf16 %v703, %v703
    %v716 = vpack.c.bf16 %v704, %v704
    %v717 = vpack.c.bf16 %v705, %v705
    %v718 = vpack.c.bf16 %v706, %v706
    %v719 = vpack.c.bf16 %v707, %v707
    %v720 = vpack.c.bf16 %v306, %v306
    %v721 = vpack.c.bf16 %v308, %v308
    %v722 = vpack.c.bf16 %v311, %v311
    %v723 = vpack.c.bf16 %v313, %v313
    %v724 = vpack.c.bf16 %v316, %v316
    %v725 = vpack.c.bf16 %v318, %v318
    %v726 = vpack.c.bf16 %v321, %v321
    %v727 = vpack.c.bf16 %v323, %v323
    %v728 = vpack.c.bf16 %v326, %v326
    %v729 = vpack.c.bf16 %v328, %v328
    %v730 = vpack.c.bf16 %v331, %v331
    %v731 = vpack.c.bf16 %v333, %v333
    %v734 = vunpack.c.l.b16 %v708
    %v735 = vunpack.c.l.b16 %v709
    %v736 = vpack.c.b16 %v735, %v734
    %v739 = vunpack.c.l.b16 %v720
    %v740 = vunpack.c.l.b16 %v721
    %v741 = vpack.c.b16 %v740, %v739
    %v744 = vsel %vm575, %v736, 0
    %746 = vmatpush.bf16.msra.mxu0 0
    %747 = vmatpush.bf16.msra.mxu0 0
    %748 = vmatpush.bf16.msra.mxu0 0
    %749 = vmatpush.bf16.msra.mxu0 0
    %750 = vmatpush.bf16.msra.mxu0 0
    %751 = vmatpush.bf16.msra.mxu0 0
    %752 = vmatpush.bf16.msra.mxu0 0
    %753 = vmatpush.bf16.msra.mxu0 %v741
    %754 = vmatmul.bf16.gmra.mxu0 %v744
    %v755 = vpop.f32.mrf.mxu0
    %v756 = vadd.f32 0.0, %v755
    %v757 = vpop.f32.mrf.mxu0
    %v758 = vadd.f32 0.0, %v757
    %759 = vdwg.mxu0
    %v762 = vunpack.c.l.b16 %v710
    %v763 = vunpack.c.l.b16 %v711
    %v764 = vpack.c.b16 %v763, %v762
    %v767 = vunpack.c.l.b16 %v722
    %v768 = vunpack.c.l.b16 %v723
    %v769 = vpack.c.b16 %v768, %v767
    %v772 = vsel %vm575, %v764, 0
    %774 = vmatpush.bf16.msra.mxu0 0
    %775 = vmatpush.bf16.msra.mxu0 0
    %776 = vmatpush.bf16.msra.mxu0 0
    %777 = vmatpush.bf16.msra.mxu0 0
    %778 = vmatpush.bf16.msra.mxu0 0
    %779 = vmatpush.bf16.msra.mxu0 0
    %780 = vmatpush.bf16.msra.mxu0 0
    %781 = vmatpush.bf16.msra.mxu0 %v769
    %782 = vmatmul.bf16.gmra.mxu0 %v772
    %v783 = vpop.f32.mrf.mxu0
    %v784 = vadd.f32 0.0, %v783
    %v785 = vpop.f32.mrf.mxu0
    %v786 = vadd.f32 0.0, %v785
    %787 = vdwg.mxu0
    %v790 = vunpack.c.l.b16 %v712
    %v791 = vunpack.c.l.b16 %v713
    %v792 = vpack.c.b16 %v791, %v790
    %v795 = vunpack.c.l.b16 %v724
    %v796 = vunpack.c.l.b16 %v725
    %v797 = vpack.c.b16 %v796, %v795
    %v800 = vsel %vm575, %v792, 0
    %802 = vmatpush.bf16.msra.mxu0 0
    %803 = vmatpush.bf16.msra.mxu0 0
    %804 = vmatpush.bf16.msra.mxu0 0
    %805 = vmatpush.bf16.msra.mxu0 0
    %806 = vmatpush.bf16.msra.mxu0 0
    %807 = vmatpush.bf16.msra.mxu0 0
    %808 = vmatpush.bf16.msra.mxu0 0
    %809 = vmatpush.bf16.msra.mxu0 %v797
    %810 = vmatmul.bf16.gmra.mxu0 %v800
    %v811 = vpop.f32.mrf.mxu0
    %v812 = vadd.f32 0.0, %v811
    %v813 = vpop.f32.mrf.mxu0
    %v814 = vadd.f32 0.0, %v813
    %815 = vdwg.mxu0
    %v818 = vunpack.c.l.b16 %v714
    %v819 = vunpack.c.l.b16 %v715
    %v820 = vpack.c.b16 %v819, %v818
    %v823 = vunpack.c.l.b16 %v726
    %v824 = vunpack.c.l.b16 %v727
    %v825 = vpack.c.b16 %v824, %v823
    %v828 = vsel %vm575, %v820, 0
    %830 = vmatpush.bf16.msra.mxu0 0
    %831 = vmatpush.bf16.msra.mxu0 0
    %832 = vmatpush.bf16.msra.mxu0 0
    %833 = vmatpush.bf16.msra.mxu0 0
    %834 = vmatpush.bf16.msra.mxu0 0
    %835 = vmatpush.bf16.msra.mxu0 0
    %836 = vmatpush.bf16.msra.mxu0 0
    %837 = vmatpush.bf16.msra.mxu0 %v825
    %838 = vmatmul.bf16.gmra.mxu0 %v828
    %v839 = vpop.f32.mrf.mxu0
    %v840 = vadd.f32 0.0, %v839
    %v841 = vpop.f32.mrf.mxu0
    %v842 = vadd.f32 0.0, %v841
    %843 = vdwg.mxu0
    %v846 = vunpack.c.l.b16 %v716
    %v847 = vunpack.c.l.b16 %v717
    %v848 = vpack.c.b16 %v847, %v846
    %v851 = vunpack.c.l.b16 %v728
    %v852 = vunpack.c.l.b16 %v729
    %v853 = vpack.c.b16 %v852, %v851
    %v856 = vsel %vm575, %v848, 0
    %858 = vmatpush.bf16.msra.mxu0 0
    %859 = vmatpush.bf16.msra.mxu0 0
    %860 = vmatpush.bf16.msra.mxu0 0
    %861 = vmatpush.bf16.msra.mxu0 0
    %862 = vmatpush.bf16.msra.mxu0 0
    %863 = vmatpush.bf16.msra.mxu0 0
    %864 = vmatpush.bf16.msra.mxu0 0
    %865 = vmatpush.bf16.msra.mxu0 %v853
    %866 = vmatmul.bf16.gmra.mxu0 %v856
    %v867 = vpop.f32.mrf.mxu0
    %v868 = vadd.f32 0.0, %v867
    %v869 = vpop.f32.mrf.mxu0
    %v870 = vadd.f32 0.0, %v869
    %871 = vdwg.mxu0
    %v874 = vunpack.c.l.b16 %v718
    %v875 = vunpack.c.l.b16 %v719
    %v876 = vpack.c.b16 %v875, %v874
    %v879 = vunpack.c.l.b16 %v730
    %v880 = vunpack.c.l.b16 %v731
    %v881 = vpack.c.b16 %v880, %v879
    %v884 = vsel %vm575, %v876, 0
    %886 = vmatpush.bf16.msra.mxu0 0
    %887 = vmatpush.bf16.msra.mxu0 0
    %888 = vmatpush.bf16.msra.mxu0 0
    %889 = vmatpush.bf16.msra.mxu0 0
    %890 = vmatpush.bf16.msra.mxu0 0
    %891 = vmatpush.bf16.msra.mxu0 0
    %892 = vmatpush.bf16.msra.mxu0 0
    %893 = vmatpush.bf16.msra.mxu0 %v881
    %894 = vmatmul.bf16.gmra.mxu0 %v884
    %v895 = vpop.f32.mrf.mxu0
    %v896 = vadd.f32 0.0, %v895
    %v897 = vpop.f32.mrf.mxu0
    %v898 = vadd.f32 0.0, %v897
    %899 = vdwg.mxu0
    %v900 = vpack.c.bf16 %v758, %v756
    %v901 = vpack.c.bf16 %v786, %v784
    %v902 = vpack.c.bf16 %v814, %v812
    %v903 = vpack.c.bf16 %v842, %v840
    %v904 = vpack.c.bf16 %v870, %v868
    %v905 = vpack.c.bf16 %v898, %v896
    %v906 = vld [vmem:[%s8] sm:$0xf]
    %v907 = vld [vmem:[%s8 + $0x4] sm:$0xf]
    %v908 = vld [vmem:[%s8 + $0x8] sm:$0xf]
    %v909 = vld [vmem:[%s8 + $0xc] sm:$0xf]
    %v910 = vld [vmem:[%s8 + $0x10] sm:$0xf]
    %v911 = vld [vmem:[%s8 + $0x14] sm:$0xf]
    %v912 = vld [vmem:[%s8 + $0x18] sm:$0xf]
    %v913 = vld [vmem:[%s8 + $0x1c] sm:$0xf]
    %v914 = vld [vmem:[%s8 + $0x20] sm:$0xf]
    %v915 = vld [vmem:[%s8 + $0x24] sm:$0xf]
    %v916 = vld [vmem:[%s8 + $0x28] sm:$0xf]
    %v917 = vld [vmem:[%s8 + $0x2c] sm:$0xf]
    %v918 = vld [vmem:[%s8 + $0x30] sm:$0xf]
    %v919 = vld [vmem:[%s8 + $0x34] sm:$0xf]
    %v920 = vld [vmem:[%s8 + $0x38] sm:$0xf]
    %v921 = vld [vmem:[%s8 + $0x3c] sm:$0xf]
    %v938 = vunpack.c.l.b16 %v906
    %v939 = vunpack.c.l.b16 %v907
    %v940 = vunpack.c.l.b16 %v908
    %v941 = vunpack.c.l.b16 %v909
    %v942 = vunpack.c.l.b16 %v910
    %v943 = vunpack.c.l.b16 %v911
    %v944 = vunpack.c.l.b16 %v912
    %v945 = vunpack.c.l.b16 %v913
    %v946 = vunpack.c.l.b16 %v914
    %v947 = vunpack.c.l.b16 %v915
    %v948 = vunpack.c.l.b16 %v916
    %v949 = vunpack.c.l.b16 %v917
    %v950 = vunpack.c.l.b16 %v918
    %v951 = vunpack.c.l.b16 %v919
    %v952 = vunpack.c.l.b16 %v920
    %v953 = vunpack.c.l.b16 %v921
    %v954 = vpack.c.b16 %v939, %v938
    %v955 = vpack.c.b16 %v941, %v940
    %v956 = vpack.c.b16 %v943, %v942
    %v957 = vpack.c.b16 %v945, %v944
    %v958 = vpack.c.b16 %v947, %v946
    %v959 = vpack.c.b16 %v949, %v948
    %v960 = vpack.c.b16 %v951, %v950
    %v961 = vpack.c.b16 %v953, %v952
    %970 = vmatpush.bf16.msra.mxu0 %v961
    %971 = vmatpush.bf16.msra.mxu0 %v960
    %972 = vmatpush.bf16.msra.mxu0 %v959
    %973 = vmatpush.bf16.msra.mxu0 %v958
    %974 = vmatpush.bf16.msra.mxu0 %v957
    %975 = vmatpush.bf16.msra.mxu0 %v956
    %976 = vmatpush.bf16.msra.mxu0 %v955
    %977 = vmatpush.bf16.msra.mxu0 %v954
    %978 = vmatmul.bf16.gmra.mxu0 %v900
    %v979 = vpop.f32.mrf.mxu0
    %v980 = vadd.f32 0.0, %v979
    %v981 = vpop.f32.mrf.mxu0
    %v982 = vadd.f32 0.0, %v981
    %983 = vmatmul.bf16.gmra.mxu0 %v901
    %v984 = vpop.f32.mrf.mxu0
    %v985 = vadd.f32 0.0, %v984
    %v986 = vpop.f32.mrf.mxu0
    %v987 = vadd.f32 0.0, %v986
    %988 = vmatmul.bf16.gmra.mxu0 %v902
    %v989 = vpop.f32.mrf.mxu0
    %v990 = vadd.f32 0.0, %v989
    %v991 = vpop.f32.mrf.mxu0
    %v992 = vadd.f32 0.0, %v991
    %993 = vmatmul.bf16.gmra.mxu0 %v903
    %v994 = vpop.f32.mrf.mxu0
    %v995 = vadd.f32 0.0, %v994
    %v996 = vpop.f32.mrf.mxu0
    %v997 = vadd.f32 0.0, %v996
    %998 = vmatmul.bf16.gmra.mxu0 %v904
    %v999 = vpop.f32.mrf.mxu0
    %v1000 = vadd.f32 0.0, %v999
    %v1001 = vpop.f32.mrf.mxu0
    %v1002 = vadd.f32 0.0, %v1001
    %1003 = vmatmul.bf16.gmra.mxu0 %v905
    %v1004 = vpop.f32.mrf.mxu0
    %v1005 = vadd.f32 0.0, %v1004
    %v1006 = vpop.f32.mrf.mxu0
    %v1007 = vadd.f32 0.0, %v1006
    %1008 = vdwg.mxu0
    %v1009 = vadd.f32 %v40, %v980
    %v1010 = vadd.f32 %v41, %v982
    %v1011 = vadd.f32 %v42, %v985
    %v1012 = vadd.f32 %v43, %v987
    %v1013 = vadd.f32 %v44, %v990
    %v1014 = vadd.f32 %v45, %v992
    %v1015 = vadd.f32 %v46, %v995
    %v1016 = vadd.f32 %v47, %v997
    %v1017 = vadd.f32 %v48, %v1000
    %v1018 = vadd.f32 %v49, %v1002
    %v1019 = vadd.f32 %v50, %v1005
    %v1020 = vadd.f32 %v51, %v1007
    %v1021 = vpack.c.bf16 %v1010, %v1009
    %v1022 = vpack.c.bf16 %v1012, %v1011
    %v1023 = vpack.c.bf16 %v1014, %v1013
    %v1024 = vpack.c.bf16 %v1016, %v1015
    %v1025 = vpack.c.bf16 %v1018, %v1017
    %v1026 = vpack.c.bf16 %v1020, %v1019
    %v1027 = vld [vmem:[%s9] sm:$0xf]
    %v1028 = vld [vmem:[%s9 + $0x4] sm:$0xf]
    %v1029 = vld [vmem:[%s9 + $0x8] sm:$0xf]
    %v1030 = vld [vmem:[%s9 + $0xc] sm:$0xf]
    %v1031 = vld [vmem:[%s9 + $0x10] sm:$0xf]
    %v1032 = vld [vmem:[%s9 + $0x14] sm:$0xf]
    %v1033 = vld [vmem:[%s9 + $0x18] sm:$0xf]
    %v1034 = vld [vmem:[%s9 + $0x1c] sm:$0xf]
    %v1035 = vld [vmem:[%s9 + $0x20] sm:$0xf]
    %v1036 = vld [vmem:[%s9 + $0x24] sm:$0xf]
    %v1037 = vld [vmem:[%s9 + $0x28] sm:$0xf]
    %v1038 = vld [vmem:[%s9 + $0x2c] sm:$0xf]
    %v1039 = vld [vmem:[%s9 + $0x30] sm:$0xf]
    %v1040 = vld [vmem:[%s9 + $0x34] sm:$0xf]
    %v1041 = vld [vmem:[%s9 + $0x38] sm:$0xf]
    %v1042 = vld [vmem:[%s9 + $0x3c] sm:$0xf]
    %v1059 = vunpack.c.l.b16 %v1027
    %v1060 = vunpack.c.l.b16 %v1028
    %v1061 = vunpack.c.l.b16 %v1029
    %v1062 = vunpack.c.l.b16 %v1030
    %v1063 = vunpack.c.l.b16 %v1031
    %v1064 = vunpack.c.l.b16 %v1032
    %v1065 = vunpack.c.l.b16 %v1033
    %v1066 = vunpack.c.l.b16 %v1034
    %v1067 = vunpack.c.l.b16 %v1035
    %v1068 = vunpack.c.l.b16 %v1036
    %v1069 = vunpack.c.l.b16 %v1037
    %v1070 = vunpack.c.l.b16 %v1038
    %v1071 = vunpack.c.l.b16 %v1039
    %v1072 = vunpack.c.l.b16 %v1040
    %v1073 = vunpack.c.l.b16 %v1041
    %v1074 = vunpack.c.l.b16 %v1042
    %v1075 = vpack.c.b16 %v1060, %v1059
    %v1076 = vpack.c.b16 %v1062, %v1061
    %v1077 = vpack.c.b16 %v1064, %v1063
    %v1078 = vpack.c.b16 %v1066, %v1065
    %v1079 = vpack.c.b16 %v1068, %v1067
    %v1080 = vpack.c.b16 %v1070, %v1069
    %v1081 = vpack.c.b16 %v1072, %v1071
    %v1082 = vpack.c.b16 %v1074, %v1073
    %1091 = vmatpush.bf16.msra.mxu0 %v1082
    %1092 = vmatpush.bf16.msra.mxu0 %v1081
    %1093 = vmatpush.bf16.msra.mxu0 %v1080
    %1094 = vmatpush.bf16.msra.mxu0 %v1079
    %1095 = vmatpush.bf16.msra.mxu0 %v1078
    %1096 = vmatpush.bf16.msra.mxu0 %v1077
    %1097 = vmatpush.bf16.msra.mxu0 %v1076
    %1098 = vmatpush.bf16.msra.mxu0 %v1075
    %1099 = vmatmul.bf16.gmra.mxu0 %v1021
    %v1100 = vpop.f32.mrf.mxu0
    %v1101 = vadd.f32 0.0, %v1100
    %v1102 = vpop.f32.mrf.mxu0
    %v1103 = vadd.f32 0.0, %v1102
    %1104 = vmatmul.bf16.gmra.mxu0 %v1022
    %v1105 = vpop.f32.mrf.mxu0
    %v1106 = vadd.f32 0.0, %v1105
    %v1107 = vpop.f32.mrf.mxu0
    %v1108 = vadd.f32 0.0, %v1107
    %1109 = vmatmul.bf16.gmra.mxu0 %v1023
    %v1110 = vpop.f32.mrf.mxu0
    %v1111 = vadd.f32 0.0, %v1110
    %v1112 = vpop.f32.mrf.mxu0
    %v1113 = vadd.f32 0.0, %v1112
    %1114 = vmatmul.bf16.gmra.mxu0 %v1024
    %v1115 = vpop.f32.mrf.mxu0
    %v1116 = vadd.f32 0.0, %v1115
    %v1117 = vpop.f32.mrf.mxu0
    %v1118 = vadd.f32 0.0, %v1117
    %1119 = vmatmul.bf16.gmra.mxu0 %v1025
    %v1120 = vpop.f32.mrf.mxu0
    %v1121 = vadd.f32 0.0, %v1120
    %v1122 = vpop.f32.mrf.mxu0
    %v1123 = vadd.f32 0.0, %v1122
    %1124 = vmatmul.bf16.gmra.mxu0 %v1026
    %v1125 = vpop.f32.mrf.mxu0
    %v1126 = vadd.f32 0.0, %v1125
    %v1127 = vpop.f32.mrf.mxu0
    %v1128 = vadd.f32 0.0, %v1127
    %1129 = vdwg.mxu0
    %v1130 = vmul.f32 %v1101, %v1101
    %v1131 = vmul.f32 %v1103, %v1103
    %v1132 = vmul.f32 %v1106, %v1106
    %v1133 = vmul.f32 %v1108, %v1108
    %v1134 = vmul.f32 %v1111, %v1111
    %v1135 = vmul.f32 %v1113, %v1113
    %v1136 = vmul.f32 %v1116, %v1116
    %v1137 = vmul.f32 %v1118, %v1118
    %v1138 = vmul.f32 %v1121, %v1121
    %v1139 = vmul.f32 %v1123, %v1123
    %v1140 = vmul.f32 %v1126, %v1126
    %v1141 = vmul.f32 %v1128, %v1128
    %v1142 = vmul.f32 %v1101, %v1130
    %v1143 = vmul.f32 %v1103, %v1131
    %v1144 = vmul.f32 %v1106, %v1132
    %v1145 = vmul.f32 %v1108, %v1133
    %v1146 = vmul.f32 %v1111, %v1134
    %v1147 = vmul.f32 %v1113, %v1135
    %v1148 = vmul.f32 %v1116, %v1136
    %v1149 = vmul.f32 %v1118, %v1137
    %v1150 = vmul.f32 %v1121, %v1138
    %v1151 = vmul.f32 %v1123, %v1139
    %v1152 = vmul.f32 %v1126, %v1140
    %v1153 = vmul.f32 %v1128, %v1141
    %v1154 = vmul.f32 %v1142, 0.044715
    %v1155 = vmul.f32 %v1143, 0.044715
    %v1156 = vmul.f32 %v1144, 0.044715
    %v1157 = vmul.f32 %v1145, 0.044715
    %v1158 = vmul.f32 %v1146, 0.044715
    %v1159 = vmul.f32 %v1147, 0.044715
    %v1160 = vmul.f32 %v1148, 0.044715
    %v1161 = vmul.f32 %v1149, 0.044715
    %v1162 = vmul.f32 %v1150, 0.044715
    %v1163 = vmul.f32 %v1151, 0.044715
    %v1164 = vmul.f32 %v1152, 0.044715
    %v1165 = vmul.f32 %v1153, 0.044715
    %v1166 = vadd.f32 %v1101, %v1154
    %v1167 = vadd.f32 %v1103, %v1155
    %v1168 = vadd.f32 %v1106, %v1156
    %v1169 = vadd.f32 %v1108, %v1157
    %v1170 = vadd.f32 %v1111, %v1158
    %v1171 = vadd.f32 %v1113, %v1159
    %v1172 = vadd.f32 %v1116, %v1160
    %v1173 = vadd.f32 %v1118, %v1161
    %v1174 = vadd.f32 %v1121, %v1162
    %v1175 = vadd.f32 %v1123, %v1163
    %v1176 = vadd.f32 %v1126, %v1164
    %v1177 = vadd.f32 %v1128, %v1165
    %v1178 = vmul.f32 %v1166, 0.7978846
    %v1179 = vmul.f32 %v1167, 0.7978846
    %v1180 = vmul.f32 %v1168, 0.7978846
    %v1181 = vmul.f32 %v1169, 0.7978846
    %v1182 = vmul.f32 %v1170, 0.7978846
    %v1183 = vmul.f32 %v1171, 0.7978846
    %v1184 = vmul.f32 %v1172, 0.7978846
    %v1185 = vmul.f32 %v1173, 0.7978846
    %v1186 = vmul.f32 %v1174, 0.7978846
    %v1187 = vmul.f32 %v1175, 0.7978846
    %v1188 = vmul.f32 %v1176, 0.7978846
    %v1189 = vmul.f32 %v1177, 0.7978846
    %v1190 = vtanh.pop %v1178
    %v1191 = vtanh.pop %v1179
    %v1192 = vtanh.pop %v1180
    %v1193 = vtanh.pop %v1181
    %v1194 = vtanh.pop %v1182
    %v1195 = vtanh.pop %v1183
    %v1196 = vtanh.pop %v1184
    %v1197 = vtanh.pop %v1185
    %v1198 = vtanh.pop %v1186
    %v1199 = vtanh.pop %v1187
    %v1200 = vtanh.pop %v1188
    %v1201 = vtanh.pop %v1189
    %v1202 = vadd.f32 %v1190, 1.0
    %v1203 = vadd.f32 %v1191, 1.0
    %v1204 = vadd.f32 %v1192, 1.0
    %v1205 = vadd.f32 %v1193, 1.0
    %v1206 = vadd.f32 %v1194, 1.0
    %v1207 = vadd.f32 %v1195, 1.0
    %v1208 = vadd.f32 %v1196, 1.0
    %v1209 = vadd.f32 %v1197, 1.0
    %v1210 = vadd.f32 %v1198, 1.0
    %v1211 = vadd.f32 %v1199, 1.0
    %v1212 = vadd.f32 %v1200, 1.0
    %v1213 = vadd.f32 %v1201, 1.0
    %v1214 = vmul.f32 %v1202, 0.5
    %v1215 = vmul.f32 %v1203, 0.5
    %v1216 = vmul.f32 %v1204, 0.5
    %v1217 = vmul.f32 %v1205, 0.5
    %v1218 = vmul.f32 %v1206, 0.5
    %v1219 = vmul.f32 %v1207, 0.5
    %v1220 = vmul.f32 %v1208, 0.5
    %v1221 = vmul.f32 %v1209, 0.5
    %v1222 = vmul.f32 %v1210, 0.5
    %v1223 = vmul.f32 %v1211, 0.5
    %v1224 = vmul.f32 %v1212, 0.5
    %v1225 = vmul.f32 %v1213, 0.5
    %v1226 = vmul.f32 %v1101, %v1214
    %v1227 = vmul.f32 %v1103, %v1215
    %v1228 = vmul.f32 %v1106, %v1216
    %v1229 = vmul.f32 %v1108, %v1217
    %v1230 = vmul.f32 %v1111, %v1218
    %v1231 = vmul.f32 %v1113, %v1219
    %v1232 = vmul.f32 %v1116, %v1220
    %v1233 = vmul.f32 %v1118, %v1221
    %v1234 = vmul.f32 %v1121, %v1222
    %v1235 = vmul.f32 %v1123, %v1223
    %v1236 = vmul.f32 %v1126, %v1224
    %v1237 = vmul.f32 %v1128, %v1225
    %v1238 = vpack.c.bf16 %v1227, %v1226
    %v1239 = vpack.c.bf16 %v1229, %v1228
    %v1240 = vpack.c.bf16 %v1231, %v1230
    %v1241 = vpack.c.bf16 %v1233, %v1232
    %v1242 = vpack.c.bf16 %v1235, %v1234
    %v1243 = vpack.c.bf16 %v1237, %v1236
    %v1244 = vld [vmem:[%s10] sm:$0xf]
    %v1245 = vld [vmem:[%s10 + $0x4] sm:$0xf]
    %v1246 = vld [vmem:[%s10 + $0x8] sm:$0xf]
    %v1247 = vld [vmem:[%s10 + $0xc] sm:$0xf]
    %v1248 = vld [vmem:[%s10 + $0x10] sm:$0xf]
    %v1249 = vld [vmem:[%s10 + $0x14] sm:$0xf]
    %v1250 = vld [vmem:[%s10 + $0x18] sm:$0xf]
    %v1251 = vld [vmem:[%s10 + $0x1c] sm:$0xf]
    %v1252 = vld [vmem:[%s10 + $0x20] sm:$0xf]
    %v1253 = vld [vmem:[%s10 + $0x24] sm:$0xf]
    %v1254 = vld [vmem:[%s10 + $0x28] sm:$0xf]
    %v1255 = vld [vmem:[%s10 + $0x2c] sm:$0xf]
    %v1256 = vld [vmem:[%s10 + $0x30] sm:$0xf]
    %v1257 = vld [vmem:[%s10 + $0x34] sm:$0xf]
    %v1258 = vld [vmem:[%s10 + $0x38] sm:$0xf]
    %v1259 = vld [vmem:[%s10 + $0x3c] sm:$0xf]
    %v1276 = vunpack.c.l.b16 %v1244
    %v1277 = vunpack.c.l.b16 %v1245
    %v1278 = vunpack.c.l.b16 %v1246
    %v1279 = vunpack.c.l.b16 %v1247
    %v1280 = vunpack.c.l.b16 %v1248
    %v1281 = vunpack.c.l.b16 %v1249
    %v1282 = vunpack.c.l.b16 %v1250
    %v1283 = vunpack.c.l.b16 %v1251
    %v1284 = vunpack.c.l.b16 %v1252
    %v1285 = vunpack.c.l.b16 %v1253
    %v1286 = vunpack.c.l.b16 %v1254
    %v1287 = vunpack.c.l.b16 %v1255
    %v1288 = vunpack.c.l.b16 %v1256
    %v1289 = vunpack.c.l.b16 %v1257
    %v1290 = vunpack.c.l.b16 %v1258
    %v1291 = vunpack.c.l.b16 %v1259
    %v1292 = vpack.c.b16 %v1277, %v1276
    %v1293 = vpack.c.b16 %v1279, %v1278
    %v1294 = vpack.c.b16 %v1281, %v1280
    %v1295 = vpack.c.b16 %v1283, %v1282
    %v1296 = vpack.c.b16 %v1285, %v1284
    %v1297 = vpack.c.b16 %v1287, %v1286
    %v1298 = vpack.c.b16 %v1289, %v1288
    %v1299 = vpack.c.b16 %v1291, %v1290
    %1308 = vmatpush.bf16.msra.mxu0 %v1299
    %1309 = vmatpush.bf16.msra.mxu0 %v1298
    %1310 = vmatpush.bf16.msra.mxu0 %v1297
    %1311 = vmatpush.bf16.msra.mxu0 %v1296
    %1312 = vmatpush.bf16.msra.mxu0 %v1295
    %1313 = vmatpush.bf16.msra.mxu0 %v1294
    %1314 = vmatpush.bf16.msra.mxu0 %v1293
    %1315 = vmatpush.bf16.msra.mxu0 %v1292
    %1316 = vmatmul.bf16.gmra.mxu0 %v1238
    %v1317 = vpop.f32.mrf.mxu0
    %v1318 = vadd.f32 0.0, %v1317
    %v1319 = vpop.f32.mrf.mxu0
    %v1320 = vadd.f32 0.0, %v1319
    %1321 = vmatmul.bf16.gmra.mxu0 %v1239
    %v1322 = vpop.f32.mrf.mxu0
    %v1323 = vadd.f32 0.0, %v1322
    %v1324 = vpop.f32.mrf.mxu0
    %v1325 = vadd.f32 0.0, %v1324
    %1326 = vmatmul.bf16.gmra.mxu0 %v1240
    %v1327 = vpop.f32.mrf.mxu0
    %v1328 = vadd.f32 0.0, %v1327
    %v1329 = vpop.f32.mrf.mxu0
    %v1330 = vadd.f32 0.0, %v1329
    %1331 = vmatmul.bf16.gmra.mxu0 %v1241
    %v1332 = vpop.f32.mrf.mxu0
    %v1333 = vadd.f32 0.0, %v1332
    %v1334 = vpop.f32.mrf.mxu0
    %v1335 = vadd.f32 0.0, %v1334
    %1336 = vmatmul.bf16.gmra.mxu0 %v1242
    %v1337 = vpop.f32.mrf.mxu0
    %v1338 = vadd.f32 0.0, %v1337
    %v1339 = vpop.f32.mrf.mxu0
    %v1340 = vadd.f32 0.0, %v1339
    %1341 = vmatmul.bf16.gmra.mxu0 %v1243
    %v1342 = vpop.f32.mrf.mxu0
    %v1343 = vadd.f32 0.0, %v1342
    %v1344 = vpop.f32.mrf.mxu0
    %v1345 = vadd.f32 0.0, %v1344
    %1346 = vdwg.mxu0
    %v1347 = vadd.f32 %v1009, %v1318
    %v1348 = vadd.f32 %v1010, %v1320
    %v1349 = vadd.f32 %v1011, %v1323
    %v1350 = vadd.f32 %v1012, %v1325
    %v1351 = vadd.f32 %v1013, %v1328
    %v1352 = vadd.f32 %v1014, %v1330
    %v1353 = vadd.f32 %v1015, %v1333
    %v1354 = vadd.f32 %v1016, %v1335
    %v1355 = vadd.f32 %v1017, %v1338
    %v1356 = vadd.f32 %v1018, %v1340
    %v1357 = vadd.f32 %v1019, %v1343
    %v1358 = vadd.f32 %v1020, %v1345
    %v1359 = vld [vmem:[%s2] sm:$0x3]
    %v1360 = vperm.slane %v1359, 0
    %v1361 = vlaneseq
    %v1362 = vshrl.u32 %v1361, 7
    %1364 = vset.pattern.permute.xlu0 %v1362
    %1365 = vperm.xlu0 %1364, %v1360
    %v1366 = vpop.permute.xlu0 %1365
    %v1367 = vlaneseq
    %v1368 = vshrl.u32 %v1367, 7
    %v1369 = vadd.s32 %v1368, 8
    %1370 = vset.pattern.permute.xlu0 %v1369
    %1371 = vperm.xlu0 %1370, %v1360
    %v1372 = vpop.permute.xlu0 %1371
    %v1373 = vperm.slane %v1359, 1
    %v1374 = vlaneseq
    %v1375 = vshrl.u32 %v1374, 7
    %1377 = vset.pattern.permute.xlu0 %v1375
    %1378 = vperm.xlu0 %1377, %v1373
    %v1379 = vpop.permute.xlu0 %1378
    %v1380 = vlaneseq
    %v1381 = vshrl.u32 %v1380, 7
    %v1382 = vadd.s32 %v1381, 8
    %1383 = vset.pattern.permute.xlu0 %v1382
    %1384 = vperm.xlu0 %1383, %v1373
    %v1385 = vpop.permute.xlu0 %1384
    %v1386 = vmul.f32 %v1347, %v1366
    %v1387 = vmul.f32 %v1348, %v1372
    %v1388 = vmul.f32 %v1349, %v1379
    %v1389 = vmul.f32 %v1350, %v1385
    %v1390 = vadd.f32 %v1386, %v1387
    %v1391 = vrot.slane %v1390, 4
    %v1392 = vadd.f32 %v1390, %v1391
    %v1393 = vrot.slane %v1392, 2
    %v1394 = vadd.f32 %v1392, %v1393
    %v1395 = vrot.slane %v1394, 1
    %v1396 = vadd.f32 %v1394, %v1395
    %v1397 = vadd.f32 %v1388, %v1389
    %v1398 = vrot.slane %v1397, 4
    %v1399 = vadd.f32 %v1397, %v1398
    %v1400 = vrot.slane %v1399, 2
    %v1401 = vadd.f32 %v1399, %v1400
    %v1402 = vrot.slane %v1401, 1
    %v1403 = vadd.f32 %v1401, %v1402
    %vm1404 = vcmask 123904
    %v1405 = vsel %vm1404, %v1359, 0.0
    %1406 = vadd.xlane.f32.xlu0 %v1405
    %v1407 = vpop.xlane.xlu0 %1406
    %v1408 = vmax.f32 %v1407, 1.0
    %v1409 = vrcp.pop %v1408
    %v1411 = vrot.slane %v1409, 1
    %v1414 = vmul.f32 %v1396, %v1409
    %v1415 = vmul.f32 %v1403, %v1411
    %v1416 = vld [vmem:[%s3] sm:$0xf]
    %v1417 = vperm.slane %v1416, 0
    %v1418 = vlaneseq
    %v1419 = vshrl.u32 %v1418, 7
    %1421 = vset.pattern.permute.xlu0 %v1419
    %1422 = vperm.xlu0 %1421, %v1417
    %v1423 = vpop.permute.xlu0 %1422
    %v1424 = vlaneseq
    %v1425 = vshrl.u32 %v1424, 7
    %v1426 = vadd.s32 %v1425, 8
    %1427 = vset.pattern.permute.xlu0 %v1426
    %1428 = vperm.xlu0 %1427, %v1417
    %v1429 = vpop.permute.xlu0 %1428
    %v1430 = vperm.slane %v1416, 1
    %v1431 = vlaneseq
    %v1432 = vshrl.u32 %v1431, 7
    %1434 = vset.pattern.permute.xlu0 %v1432
    %1435 = vperm.xlu0 %1434, %v1430
    %v1436 = vpop.permute.xlu0 %1435
    %v1437 = vlaneseq
    %v1438 = vshrl.u32 %v1437, 7
    %v1439 = vadd.s32 %v1438, 8
    %1440 = vset.pattern.permute.xlu0 %v1439
    %1441 = vperm.xlu0 %1440, %v1430
    %v1442 = vpop.permute.xlu0 %1441
    %v1443 = vperm.slane %v1416, 2
    %v1444 = vlaneseq
    %v1445 = vshrl.u32 %v1444, 7
    %1447 = vset.pattern.permute.xlu0 %v1445
    %1448 = vperm.xlu0 %1447, %v1443
    %v1449 = vpop.permute.xlu0 %1448
    %v1450 = vlaneseq
    %v1451 = vshrl.u32 %v1450, 7
    %v1452 = vadd.s32 %v1451, 8
    %1453 = vset.pattern.permute.xlu0 %v1452
    %1454 = vperm.xlu0 %1453, %v1443
    %v1455 = vpop.permute.xlu0 %1454
    %v1456 = vperm.slane %v1416, 3
    %v1457 = vlaneseq
    %v1458 = vshrl.u32 %v1457, 7
    %1460 = vset.pattern.permute.xlu0 %v1458
    %1461 = vperm.xlu0 %1460, %v1456
    %v1462 = vpop.permute.xlu0 %1461
    %v1463 = vlaneseq
    %v1464 = vshrl.u32 %v1463, 7
    %v1465 = vadd.s32 %v1464, 8
    %1466 = vset.pattern.permute.xlu0 %v1465
    %1467 = vperm.xlu0 %1466, %v1456
    %v1468 = vpop.permute.xlu0 %1467
    %v1469 = vmul.f32 %v1351, %v1423
    %v1470 = vmul.f32 %v1352, %v1429
    %v1471 = vmul.f32 %v1353, %v1436
    %v1472 = vmul.f32 %v1354, %v1442
    %v1473 = vmul.f32 %v1355, %v1449
    %v1474 = vmul.f32 %v1356, %v1455
    %v1475 = vmul.f32 %v1357, %v1462
    %v1476 = vmul.f32 %v1358, %v1468
    %v1477 = vadd.f32 %v1469, %v1470
    %v1478 = vrot.slane %v1477, 4
    %v1479 = vadd.f32 %v1477, %v1478
    %v1480 = vrot.slane %v1479, 2
    %v1481 = vadd.f32 %v1479, %v1480
    %v1482 = vrot.slane %v1481, 1
    %v1483 = vadd.f32 %v1481, %v1482
    %v1484 = vadd.f32 %v1471, %v1472
    %v1485 = vrot.slane %v1484, 4
    %v1486 = vadd.f32 %v1484, %v1485
    %v1487 = vrot.slane %v1486, 2
    %v1488 = vadd.f32 %v1486, %v1487
    %v1489 = vrot.slane %v1488, 1
    %v1490 = vadd.f32 %v1488, %v1489
    %v1491 = vadd.f32 %v1473, %v1474
    %v1492 = vrot.slane %v1491, 4
    %v1493 = vadd.f32 %v1491, %v1492
    %v1494 = vrot.slane %v1493, 2
    %v1495 = vadd.f32 %v1493, %v1494
    %v1496 = vrot.slane %v1495, 1
    %v1497 = vadd.f32 %v1495, %v1496
    %v1498 = vadd.f32 %v1475, %v1476
    %v1499 = vrot.slane %v1498, 4
    %v1500 = vadd.f32 %v1498, %v1499
    %v1501 = vrot.slane %v1500, 2
    %v1502 = vadd.f32 %v1500, %v1501
    %v1503 = vrot.slane %v1502, 1
    %v1504 = vadd.f32 %v1502, %v1503
    %vm1505 = vcmask 125952
    %v1506 = vsel %vm1505, %v1416, 0.0
    %1507 = vadd.xlane.f32.xlu0 %v1506
    %v1508 = vpop.xlane.xlu0 %1507
    %v1509 = vmax.f32 %v1508, 1.0
    %v1510 = vrcp.pop %v1509
    %v1512 = vrot.slane %v1510, 1
    %v1513 = vrot.slane %v1510, 2
    %v1514 = vrot.slane %v1510, 3
    %v1519 = vmul.f32 %v1483, %v1510
    %v1520 = vmul.f32 %v1490, %v1512
    %v1521 = vmul.f32 %v1497, %v1513
    %v1522 = vmul.f32 %v1504, %v1514
    %v1523 = vld [vmem:[%s4] sm:$0xf]
    %v1524 = vperm.slane %v1523, 0
    %v1525 = vlaneseq
    %v1526 = vshrl.u32 %v1525, 7
    %1528 = vset.pattern.permute.xlu0 %v1526
    %1529 = vperm.xlu0 %1528, %v1524
    %v1530 = vpop.permute.xlu0 %1529
    %v1531 = vlaneseq
    %v1532 = vshrl.u32 %v1531, 7
    %v1533 = vadd.s32 %v1532, 8
    %1534 = vset.pattern.permute.xlu0 %v1533
    %1535 = vperm.xlu0 %1534, %v1524
    %v1536 = vpop.permute.xlu0 %1535
    %v1537 = vperm.slane %v1523, 1
    %v1538 = vlaneseq
    %v1539 = vshrl.u32 %v1538, 7
    %1541 = vset.pattern.permute.xlu0 %v1539
    %1542 = vperm.xlu0 %1541, %v1537
    %v1543 = vpop.permute.xlu0 %1542
    %v1544 = vlaneseq
    %v1545 = vshrl.u32 %v1544, 7
    %v1546 = vadd.s32 %v1545, 8
    %1547 = vset.pattern.permute.xlu0 %v1546
    %1548 = vperm.xlu0 %1547, %v1537
    %v1549 = vpop.permute.xlu0 %1548
    %v1550 = vperm.slane %v1523, 2
    %v1551 = vlaneseq
    %v1552 = vshrl.u32 %v1551, 7
    %1554 = vset.pattern.permute.xlu0 %v1552
    %1555 = vperm.xlu0 %1554, %v1550
    %v1556 = vpop.permute.xlu0 %1555
    %v1557 = vlaneseq
    %v1558 = vshrl.u32 %v1557, 7
    %v1559 = vadd.s32 %v1558, 8
    %1560 = vset.pattern.permute.xlu0 %v1559
    %1561 = vperm.xlu0 %1560, %v1550
    %v1562 = vpop.permute.xlu0 %1561
    %v1563 = vperm.slane %v1523, 3
    %v1564 = vlaneseq
    %v1565 = vshrl.u32 %v1564, 7
    %1567 = vset.pattern.permute.xlu0 %v1565
    %1568 = vperm.xlu0 %1567, %v1563
    %v1569 = vpop.permute.xlu0 %1568
    %v1570 = vlaneseq
    %v1571 = vshrl.u32 %v1570, 7
    %v1572 = vadd.s32 %v1571, 8
    %1573 = vset.pattern.permute.xlu0 %v1572
    %1574 = vperm.xlu0 %1573, %v1563
    %v1575 = vpop.permute.xlu0 %1574
    %v1576 = vmul.f32 %v1351, %v1530
    %v1577 = vmul.f32 %v1352, %v1536
    %v1578 = vmul.f32 %v1353, %v1543
    %v1579 = vmul.f32 %v1354, %v1549
    %v1580 = vmul.f32 %v1355, %v1556
    %v1581 = vmul.f32 %v1356, %v1562
    %v1582 = vmul.f32 %v1357, %v1569
    %v1583 = vmul.f32 %v1358, %v1575
    %v1584 = vadd.f32 %v1576, %v1577
    %v1585 = vrot.slane %v1584, 4
    %v1586 = vadd.f32 %v1584, %v1585
    %v1587 = vrot.slane %v1586, 2
    %v1588 = vadd.f32 %v1586, %v1587
    %v1589 = vrot.slane %v1588, 1
    %v1590 = vadd.f32 %v1588, %v1589
    %v1591 = vadd.f32 %v1578, %v1579
    %v1592 = vrot.slane %v1591, 4
    %v1593 = vadd.f32 %v1591, %v1592
    %v1594 = vrot.slane %v1593, 2
    %v1595 = vadd.f32 %v1593, %v1594
    %v1596 = vrot.slane %v1595, 1
    %v1597 = vadd.f32 %v1595, %v1596
    %v1598 = vadd.f32 %v1580, %v1581
    %v1599 = vrot.slane %v1598, 4
    %v1600 = vadd.f32 %v1598, %v1599
    %v1601 = vrot.slane %v1600, 2
    %v1602 = vadd.f32 %v1600, %v1601
    %v1603 = vrot.slane %v1602, 1
    %v1604 = vadd.f32 %v1602, %v1603
    %v1605 = vadd.f32 %v1582, %v1583
    %v1606 = vrot.slane %v1605, 4
    %v1607 = vadd.f32 %v1605, %v1606
    %v1608 = vrot.slane %v1607, 2
    %v1609 = vadd.f32 %v1607, %v1608
    %v1610 = vrot.slane %v1609, 1
    %v1611 = vadd.f32 %v1609, %v1610
    %v1612 = vsel %vm1505, %v1523, 0.0
    %1613 = vadd.xlane.f32.xlu0 %v1612
    %v1614 = vpop.xlane.xlu0 %1613
    %v1615 = vmax.f32 %v1614, 1.0
    %v1616 = vrcp.pop %v1615
    %v1618 = vrot.slane %v1616, 1
    %v1619 = vrot.slane %v1616, 2
    %v1620 = vrot.slane %v1616, 3
    %v1625 = vmul.f32 %v1590, %v1616
    %v1626 = vmul.f32 %v1597, %v1618
    %v1627 = vmul.f32 %v1604, %v1619
    %v1628 = vmul.f32 %v1611, %v1620
    %v1629 = vperm.slane %v1414, 0
    %v1630 = vperm.slane %v1415, 0
    %v1635 = vrot.slane %v1520, 7
    %vm1636 = vcmask 1041409
    %v1637 = vsel %vm1636, %v1635, %v1519
    %v1638 = vrot.slane %v1522, 7
    %v1639 = vsel %vm1636, %v1638, %v1521
    %v1642 = vmul.f32 %v1629, %v1637
    %v1643 = vmul.f32 %v1630, %v1639
    %vm1644 = vcmask 1041408
    %v1645 = vsel %vm1644, %v1642, 0.0
    %1646 = vadd.xlane.f32.xlu0 %v1645
    %v1647 = vpop.xlane.xlu0 %1646
    %v1648 = vsel %vm1644, %v1643, 0.0
    %1649 = vadd.xlane.f32.xlu0 %v1648
    %v1650 = vpop.xlane.xlu0 %1649
    %v1651 = vmul.f32 %v1414, %v1414
    %v1652 = vmul.f32 %v1415, %v1415
    %vm1653 = vcmask 1040384
    %v1654 = vsel %vm1653, %v1651, 0.0
    %1655 = vadd.xlane.f32.xlu0 %v1654
    %v1656 = vpop.xlane.xlu0 %1655
    %v1657 = vsel %vm1653, %v1652, 0.0
    %1658 = vadd.xlane.f32.xlu0 %v1657
    %v1659 = vpop.xlane.xlu0 %1658
    %v1660 = vrsqrt.pop %v1656
    %v1661 = vmul.f32 %v1660, %v1656
    %v1662 = vmul.f32 %v1661, %v1660
    %v1663 = vmul.f32 0.5, %v1662
    %v1664 = vsub.f32 1.5, %v1663
    %v1665 = vmul.f32 %v1660, %v1664
    %v1666 = vmul.f32 %v1656, %v1665
    %vm1667 = vcmp.eq.f32.partialorder %v1656, inf
    %v1668 = vsel %vm1667, %v1656, %v1666
    %vm1669 = vcmp.eq.f32.partialorder %v1656, 0.0
    %v1670 = vand.u32 %v1656, 2147483648
    %v1671 = vsel %vm1669, %v1670, %v1668
    %v1672 = vrsqrt.pop %v1659
    %v1673 = vmul.f32 %v1672, %v1659
    %v1674 = vmul.f32 %v1673, %v1672
    %v1675 = vmul.f32 0.5, %v1674
    %v1676 = vsub.f32 1.5, %v1675
    %v1677 = vmul.f32 %v1672, %v1676
    %v1678 = vmul.f32 %v1659, %v1677
    %vm1679 = vcmp.eq.f32.partialorder %v1659, inf
    %v1680 = vsel %vm1679, %v1659, %v1678
    %vm1681 = vcmp.eq.f32.partialorder %v1659, 0.0
    %v1682 = vand.u32 %v1659, 2147483648
    %v1683 = vsel %vm1681, %v1682, %v1680
    %v1684 = vmul.f32 %v1519, %v1519
    %v1685 = vmul.f32 %v1520, %v1520
    %v1686 = vmul.f32 %v1521, %v1521
    %v1687 = vmul.f32 %v1522, %v1522
    %v1692 = vrot.slane %v1685, 7
    %v1693 = vsel %vm1636, %v1692, %v1684
    %v1694 = vrot.slane %v1687, 7
    %v1695 = vsel %vm1636, %v1694, %v1686
    %v1698 = vsel %vm1644, %v1693, 0.0
    %1699 = vadd.xlane.f32.xlu0 %v1698
    %v1700 = vpop.xlane.xlu0 %1699
    %v1701 = vsel %vm1644, %v1695, 0.0
    %1702 = vadd.xlane.f32.xlu0 %v1701
    %v1703 = vpop.xlane.xlu0 %1702
    %v1704 = vrsqrt.pop %v1700
    %v1705 = vmul.f32 %v1704, %v1700
    %v1706 = vmul.f32 %v1705, %v1704
    %v1707 = vmul.f32 0.5, %v1706
    %v1708 = vsub.f32 1.5, %v1707
    %v1709 = vmul.f32 %v1704, %v1708
    %v1710 = vmul.f32 %v1700, %v1709
    %vm1711 = vcmp.eq.f32.partialorder %v1700, inf
    %v1712 = vsel %vm1711, %v1700, %v1710
    %vm1713 = vcmp.eq.f32.partialorder %v1700, 0.0
    %v1714 = vand.u32 %v1700, 2147483648
    %v1715 = vsel %vm1713, %v1714, %v1712
    %v1716 = vrsqrt.pop %v1703
    %v1717 = vmul.f32 %v1716, %v1703
    %v1718 = vmul.f32 %v1717, %v1716
    %v1719 = vmul.f32 0.5, %v1718
    %v1720 = vsub.f32 1.5, %v1719
    %v1721 = vmul.f32 %v1716, %v1720
    %v1722 = vmul.f32 %v1703, %v1721
    %vm1723 = vcmp.eq.f32.partialorder %v1703, inf
    %v1724 = vsel %vm1723, %v1703, %v1722
    %vm1725 = vcmp.eq.f32.partialorder %v1703, 0.0
    %v1726 = vand.u32 %v1703, 2147483648
    %v1727 = vsel %vm1725, %v1726, %v1724
    %v1728 = vperm.slane %v1671, 0
    %v1729 = vperm.slane %v1683, 0
    %v1730 = vmul.f32 %v1728, %v1715
    %v1731 = vmul.f32 %v1729, %v1727
    %v1732 = vmax.f32 %v1730, 1e-08
    %v1733 = vmax.f32 %v1731, 1e-08
    %v1734 = vrcp.pop %v1732
    %v1735 = vmul.f32 %v1732, %v1734
    %v1736 = vsub.f32 1.0, %v1735
    %v1737 = vmul.f32 %v1734, %v1736
    %v1738 = vadd.f32 %v1734, %v1737
    %vm1739 = vweird.f32 %v1732
    %vm1740 = vweird.f32 %v1734
    %vm1741 = vmor %vm1739, %vm1740
    %v1742 = vsel %vm1741, %v1734, %v1738
    %v1743 = vand.u32 2147483647, %v1732
    %vm1744 = vcmp.eq.f32.partialorder %v1743, 8.507059e+37
    %v1745 = vand.u32 %v1732, 2147483648
    %v1746 = vor.u32 1.1754944e-38, %v1745
    %v1747 = vsel %vm1744, %v1746, %v1742
    %v1748 = vmul.f32 %v1647, %v1747
    %v1749 = vrcp.pop %v1733
    %v1750 = vmul.f32 %v1733, %v1749
    %v1751 = vsub.f32 1.0, %v1750
    %v1752 = vmul.f32 %v1749, %v1751
    %v1753 = vadd.f32 %v1749, %v1752
    %vm1754 = vweird.f32 %v1733
    %vm1755 = vweird.f32 %v1749
    %vm1756 = vmor %vm1754, %vm1755
    %v1757 = vsel %vm1756, %v1749, %v1753
    %v1758 = vand.u32 2147483647, %v1733
    %vm1759 = vcmp.eq.f32.partialorder %v1758, 8.507059e+37
    %v1760 = vand.u32 %v1733, 2147483648
    %v1761 = vor.u32 1.1754944e-38, %v1760
    %v1762 = vsel %vm1759, %v1761, %v1757
    %v1763 = vmul.f32 %v1650, %v1762
    %v1768 = vrot.slane %v1626, 7
    %v1769 = vsel %vm1636, %v1768, %v1625
    %v1770 = vrot.slane %v1628, 7
    %v1771 = vsel %vm1636, %v1770, %v1627
    %v1774 = vmul.f32 %v1629, %v1769
    %v1775 = vmul.f32 %v1630, %v1771
    %v1776 = vsel %vm1644, %v1774, 0.0
    %1777 = vadd.xlane.f32.xlu0 %v1776
    %v1778 = vpop.xlane.xlu0 %1777
    %v1779 = vsel %vm1644, %v1775, 0.0
    %1780 = vadd.xlane.f32.xlu0 %v1779
    %v1781 = vpop.xlane.xlu0 %1780
    %v1782 = vmul.f32 %v1625, %v1625
    %v1783 = vmul.f32 %v1626, %v1626
    %v1784 = vmul.f32 %v1627, %v1627
    %v1785 = vmul.f32 %v1628, %v1628
    %v1790 = vrot.slane %v1783, 7
    %v1791 = vsel %vm1636, %v1790, %v1782
    %v1792 = vrot.slane %v1785, 7
    %v1793 = vsel %vm1636, %v1792, %v1784
    %v1796 = vsel %vm1644, %v1791, 0.0
    %1797 = vadd.xlane.f32.xlu0 %v1796
    %v1798 = vpop.xlane.xlu0 %1797
    %v1799 = vsel %vm1644, %v1793, 0.0
    %1800 = vadd.xlane.f32.xlu0 %v1799
    %v1801 = vpop.xlane.xlu0 %1800
    %v1802 = vrsqrt.pop %v1798
    %v1803 = vmul.f32 %v1802, %v1798
    %v1804 = vmul.f32 %v1803, %v1802
    %v1805 = vmul.f32 0.5, %v1804
    %v1806 = vsub.f32 1.5, %v1805
    %v1807 = vmul.f32 %v1802, %v1806
    %v1808 = vmul.f32 %v1798, %v1807
    %vm1809 = vcmp.eq.f32.partialorder %v1798, inf
    %v1810 = vsel %vm1809, %v1798, %v1808
    %vm1811 = vcmp.eq.f32.partialorder %v1798, 0.0
    %v1812 = vand.u32 %v1798, 2147483648
    %v1813 = vsel %vm1811, %v1812, %v1810
    %v1814 = vrsqrt.pop %v1801
    %v1815 = vmul.f32 %v1814, %v1801
    %v1816 = vmul.f32 %v1815, %v1814
    %v1817 = vmul.f32 0.5, %v1816
    %v1818 = vsub.f32 1.5, %v1817
    %v1819 = vmul.f32 %v1814, %v1818
    %v1820 = vmul.f32 %v1801, %v1819
    %vm1821 = vcmp.eq.f32.partialorder %v1801, inf
    %v1822 = vsel %vm1821, %v1801, %v1820
    %vm1823 = vcmp.eq.f32.partialorder %v1801, 0.0
    %v1824 = vand.u32 %v1801, 2147483648
    %v1825 = vsel %vm1823, %v1824, %v1822
    %v1826 = vmul.f32 %v1728, %v1813
    %v1827 = vmul.f32 %v1729, %v1825
    %v1828 = vmax.f32 %v1826, 1e-08
    %v1829 = vmax.f32 %v1827, 1e-08
    %v1830 = vrcp.pop %v1828
    %v1831 = vmul.f32 %v1828, %v1830
    %v1832 = vsub.f32 1.0, %v1831
    %v1833 = vmul.f32 %v1830, %v1832
    %v1834 = vadd.f32 %v1830, %v1833
    %vm1835 = vweird.f32 %v1828
    %vm1836 = vweird.f32 %v1830
    %vm1837 = vmor %vm1835, %vm1836
    %v1838 = vsel %vm1837, %v1830, %v1834
    %v1839 = vand.u32 2147483647, %v1828
    %vm1840 = vcmp.eq.f32.partialorder %v1839, 8.507059e+37
    %v1841 = vand.u32 %v1828, 2147483648
    %v1842 = vor.u32 1.1754944e-38, %v1841
    %v1843 = vsel %vm1840, %v1842, %v1838
    %v1844 = vmul.f32 %v1778, %v1843
    %v1845 = vrcp.pop %v1829
    %v1846 = vmul.f32 %v1829, %v1845
    %v1847 = vsub.f32 1.0, %v1846
    %v1848 = vmul.f32 %v1845, %v1847
    %v1849 = vadd.f32 %v1845, %v1848
    %vm1850 = vweird.f32 %v1829
    %vm1851 = vweird.f32 %v1845
    %vm1852 = vmor %vm1850, %vm1851
    %v1853 = vsel %vm1852, %v1845, %v1849
    %v1854 = vand.u32 2147483647, %v1829
    %vm1855 = vcmp.eq.f32.partialorder %v1854, 8.507059e+37
    %v1856 = vand.u32 %v1829, 2147483648
    %v1857 = vor.u32 1.1754944e-38, %v1856
    %v1858 = vsel %vm1855, %v1857, %v1853
    %v1859 = vmul.f32 %v1781, %v1858
    %v1860 = vld [vmem:[%s5] sm:$0x3]
    %v1861 = vmax.f32 %v1748, 0.0
    %v1862 = vmax.f32 %v1763, 0.0
    %v1864 = vperm.slane %v1860, 0
    %v1865 = vlaneseq
    %v1866 = vshrl.u32 %v1865, 7
    %1868 = vset.pattern.permute.xlu0 %v1866
    %1869 = vperm.xlu0 %1868, %v1864
    %v1870 = vpop.permute.xlu0 %1869
    %v1871 = vperm.slane %v1860, 1
    %v1872 = vlaneseq
    %v1873 = vshrl.u32 %v1872, 7
    %1875 = vset.pattern.permute.xlu0 %v1873
    %1876 = vperm.xlu0 %1875, %v1871
    %v1877 = vpop.permute.xlu0 %1876
    %v1880 = vmul.f32 %v1748, %v1870
    %v1881 = vmul.f32 %v1763, %v1877
    %v1882 = vsub.f32 %v1861, %v1880
    %v1883 = vsub.f32 %v1862, %v1881
    %v1884 = vand.u32 2147483647, %v1748
    %v1885 = vand.u32 2147483647, %v1763
    %v1886 = vsub.f32 0.0, %v1884
    %v1887 = vsub.f32 0.0, %v1885
    %v1888 = vmul.f32 %v1886, 1.442695
    %v1889 = vpow.pop %v1888
    %v1890 = vmul.f32 %v1887, 1.442695
    %v1891 = vpow.pop %v1890
    %v1892 = vadd.f32 %v1889, 1.0
    %v1893 = vlog2.pop %v1892
    %v1894 = vmul.f32 %v1893, 0.6931472
    %v1895 = vmul.f32 -0.5, %v1889
    %v1896 = vadd.f32 %v1895, 1.0
    %v1897 = vmul.f32 %v1896, %v1889
    %v1898 = vand.u32 2147483647, %v1889
    %vm1899 = vcmp.lt.f32.partialorder %v1898, 0.0004427343
    %v1900 = vsel %vm1899, %v1897, %v1894
    %v1901 = vadd.f32 %v1891, 1.0
    %v1902 = vlog2.pop %v1901
    %v1903 = vmul.f32 %v1902, 0.6931472
    %v1904 = vmul.f32 -0.5, %v1891
    %v1905 = vadd.f32 %v1904, 1.0
    %v1906 = vmul.f32 %v1905, %v1891
    %v1907 = vand.u32 2147483647, %v1891
    %vm1908 = vcmp.lt.f32.partialorder %v1907, 0.0004427343
    %v1909 = vsel %vm1908, %v1906, %v1903
    %v1910 = vadd.f32 %v1882, %v1900
    %v1911 = vadd.f32 %v1883, %v1909
    %1914 = vset.pattern.permute.xlu0 0
    %1915 = vperm.xlu0 %1914, %v1910
    %v1916 = vpop.permute.xlu0 %1915
    %1917 = vset.pattern.permute.xlu0 0
    %1918 = vperm.xlu0 %1917, %v1911
    %v1919 = vpop.permute.xlu0 %1918
    %v1920 = vlaneseq
    %v1921 = vand.u32 %v1920, 127
    %v1922 = vperm.slane %v1916, %v1921
    %v1923 = vperm.slane %v1919, %v1921
    %v1924 = vsel %vm1636, %v1923, %v1922
    %vm1926 = vcmask 9216
    %v1927 = vsel %vm1926, %v1924, 0.0
    %1928 = vadd.xlane.f32.xlu0 %v1927
    %v1929 = vpop.xlane.xlu0 %1928
    %v1930 = vrot.slane %v1929, 4
    %v1931 = vadd.f32 %v1929, %v1930
    %v1932 = vrot.slane %v1931, 2
    %v1933 = vadd.f32 %v1931, %v1932
    %v1934 = vrot.slane %v1933, 1
    %v1935 = vadd.f32 %v1933, %v1934
    %s1936 = vtos %v1935
    %v1937 = vrcp.pop 4.0
    %v1938 = vmul.f32 4.0, %v1937
    %v1939 = vsub.f32 1.0, %v1938
    %v1940 = vmul.f32 %v1937, %v1939
    %v1941 = vadd.f32 %v1937, %v1940
    %vm1942 = vweird.f32 %v1937
    %v1943 = vsel %vm1942, %v1937, %v1941
    %s1944 = vtos %v1943
    %s1945 = smul.f32 %s1936, %s1944
    %v1946 = vld [vmem:[%s6] sm:$0x3]
    %v1947 = vmax.f32 %v1844, 0.0
    %v1948 = vmax.f32 %v1859, 0.0
    %v1950 = vperm.slane %v1946, 0
    %v1951 = vlaneseq
    %v1952 = vshrl.u32 %v1951, 7
    %1954 = vset.pattern.permute.xlu0 %v1952
    %1955 = vperm.xlu0 %1954, %v1950
    %v1956 = vpop.permute.xlu0 %1955
    %v1957 = vperm.slane %v1946, 1
    %v1958 = vlaneseq
    %v1959 = vshrl.u32 %v1958, 7
    %1961 = vset.pattern.permute.xlu0 %v1959
    %1962 = vperm.xlu0 %1961, %v1957
    %v1963 = vpop.permute.xlu0 %1962
    %v1966 = vmul.f32 %v1844, %v1956
    %v1967 = vmul.f32 %v1859, %v1963
    %v1968 = vsub.f32 %v1947, %v1966
    %v1969 = vsub.f32 %v1948, %v1967
    %v1970 = vand.u32 2147483647, %v1844
    %v1971 = vand.u32 2147483647, %v1859
    %v1972 = vsub.f32 0.0, %v1970
    %v1973 = vsub.f32 0.0, %v1971
    %v1974 = vmul.f32 %v1972, 1.442695
    %v1975 = vpow.pop %v1974
    %v1976 = vmul.f32 %v1973, 1.442695
    %v1977 = vpow.pop %v1976
    %v1978 = vadd.f32 %v1975, 1.0
    %v1979 = vlog2.pop %v1978
    %v1980 = vmul.f32 %v1979, 0.6931472
    %v1981 = vmul.f32 -0.5, %v1975
    %v1982 = vadd.f32 %v1981, 1.0
    %v1983 = vmul.f32 %v1982, %v1975
    %v1984 = vand.u32 2147483647, %v1975
    %vm1985 = vcmp.lt.f32.partialorder %v1984, 0.0004427343
    %v1986 = vsel %vm1985, %v1983, %v1980
    %v1987 = vadd.f32 %v1977, 1.0
    %v1988 = vlog2.pop %v1987
    %v1989 = vmul.f32 %v1988, 0.6931472
    %v1990 = vmul.f32 -0.5, %v1977
    %v1991 = vadd.f32 %v1990, 1.0
    %v1992 = vmul.f32 %v1991, %v1977
    %v1993 = vand.u32 2147483647, %v1977
    %vm1994 = vcmp.lt.f32.partialorder %v1993, 0.0004427343
    %v1995 = vsel %vm1994, %v1992, %v1989
    %v1996 = vadd.f32 %v1968, %v1986
    %v1997 = vadd.f32 %v1969, %v1995
    %2000 = vset.pattern.permute.xlu0 0
    %2001 = vperm.xlu0 %2000, %v1996
    %v2002 = vpop.permute.xlu0 %2001
    %2003 = vset.pattern.permute.xlu0 0
    %2004 = vperm.xlu0 %2003, %v1997
    %v2005 = vpop.permute.xlu0 %2004
    %v2006 = vperm.slane %v2002, %v1921
    %v2007 = vperm.slane %v2005, %v1921
    %v2008 = vsel %vm1636, %v2007, %v2006
    %v2010 = vsel %vm1926, %v2008, 0.0
    %2011 = vadd.xlane.f32.xlu0 %v2010
    %v2012 = vpop.xlane.xlu0 %2011
    %v2013 = vrot.slane %v2012, 4
    %v2014 = vadd.f32 %v2012, %v2013
    %v2015 = vrot.slane %v2014, 2
    %v2016 = vadd.f32 %v2014, %v2015
    %v2017 = vrot.slane %v2016, 1
    %v2018 = vadd.f32 %v2016, %v2017
    %s2019 = vtos %v2018
    %v2020 = vrcp.pop 4.0
    %v2021 = vmul.f32 4.0, %v2020
    %v2022 = vsub.f32 1.0, %v2021
    %v2023 = vmul.f32 %v2020, %v2022
    %v2024 = vadd.f32 %v2020, %v2023
    %vm2025 = vweird.f32 %v2020
    %v2026 = vsel %vm2025, %v2020, %v2024
    %s2027 = vtos %v2026
    %s2028 = smul.f32 %s2019, %s2027
    %s2029 = sadd.f32 %s1945, %s2028
    %s2030 = smul.f32 %s2029, 0.5
    %v2031 = vstv %s2030
    %vm2032 = vcmask 0
    %2033 = vst.msk [vmem:[#allocation2] sm:$0x1] %vm2032, %v2031
    // Predicated region
    $region46: #{forward_training.1} parent=1 // pred_check
      _
    $region47: #{forward_training.1} parent=1 // pred_check_branch
      %2035 = sbr.rel (0) target = $region49
    $region48: #{forward_training.1} parent=1 // pred_region
      %2037 = vsyncadd [#allocation3], 0
      %s2039 = sshll.u32 [#allocation2], 4
      %s2040 = int_to_ptr.vmem [resolvable:$true] %s2039
      %s2041 = sshll.u32 %s11, 4
      %s2042 = int_to_ptr.hbm [resolvable:$true] %s2041
      %2044 = dma.vmem_to_hbm [thread:$0]  %s2040, 16, %s2042, [#allocation3]
    $region49: #{forward_training.1} parent=1 // pred_fallthru
      _
    // Predicated region
    $region50: #{forward_training.1} parent=1 // pred_check
      _
    $region51: #{forward_training.1} parent=1 // pred_check_branch
      %2046 = sbr.rel (0) target = $region53
    $region52: #{forward_training.1} parent=1 // pred_region
      %2048 = dma.done [#allocation3], 16
    $region53: #{forward_training.1} parent=1 // pred_fallthru
      _
    %2049 = vsyncpa [#allocation3], 1

</llo_original>
